<compile_context>
chip_gen: v5e
topology: v5e:2x2
jax: 0.10.0
libtpu: 0.0.40
codegen_flags: <defaults>
</compile_context>

<pallas_src>
import functools

import jax
import jax.numpy as jnp
from jax.experimental import pallas as pl
from jax.experimental.pallas import tpu as pltpu

# Activations are staged at this (8-aligned) sublane offset inside the padded
# staging scratch; must be >= the largest left pad ((8-1)//2 == 3).
_PAD0 = 8


# --------------------------------------------------------------------------
# Fused kernel: 4 x (Conv1d same-pad + folded BN + ReLU) + time-mean + Linear
# --------------------------------------------------------------------------
def _small_fcn_kernel(num_layers, *refs):
    # refs = (x, w1, s1, ..., wN, sN, w_final, b_final,   # inputs
    #         feat_out, logits_out,                        # outputs
    #         pad_scratch)                                 # VMEM scratch
    x_ref = refs[0]
    layer_refs = [(refs[1 + 2 * i], refs[2 + 2 * i]) for i in range(num_layers)]
    wf_ref = refs[1 + 2 * num_layers]
    bf_ref = refs[2 + 2 * num_layers]
    feat_ref = refs[3 + 2 * num_layers]
    logits_ref = refs[4 + 2 * num_layers]
    pad_ref = refs[5 + 2 * num_layers]

    b_sz, seq_len, _ = x_ref.shape

    # Zero the staging buffer once.  Only rows [_PAD0, _PAD0+L) are ever written,
    # and each layer reads exactly the lanes it just wrote there, so the halo
    # rows stay zero for every layer.
    pad_ref[...] = jnp.zeros(pad_ref.shape, pad_ref.dtype)

    for b in range(b_sz):                 # tiny static batch -> fully unrolled
        act = x_ref[b]                    # (L, C_in) float32, channels on lanes
        for w_ref, s_ref in layer_refs:
            ksize, cin, cout = w_ref.shape
            # Conv1dSamePadding (okrasolar FCN baseline): total pad = k-1 with
            # the extra element on the RIGHT (F.pad(x, [0, 1]) then symmetric
            # (k-1)//2 on both sides), so left = (k-1)//2, right = k-1-left.
            left = (ksize - 1) // 2
            # In-kernel "same" padding: drop the activation at an 8-aligned row
            # offset inside the zero halo (aligned store, unaligned reads only).
            pad_ref[b, _PAD0:_PAD0 + seq_len, :cin] = act
            acc = jnp.zeros((seq_len, cout), jnp.float32)
            for tap in range(ksize):      # conv as K shifted MXU matmuls
                start = _PAD0 - left + tap
                acc = acc + jnp.dot(
                    pad_ref[b, start:start + seq_len, :cin], w_ref[tap],
                    preferred_element_type=jnp.float32)
            # conv bias + eval-mode BatchNorm pre-folded into (w, shift); ReLU.
            act = jnp.maximum(acc + s_ref[...], 0.0)
            # TODO(synk): nn.Dropout between blocks is stochastic only in train
            # mode; inference forward is identity, so nothing is emitted here.
        feat_ref[b:b + 1, :] = jnp.mean(act, axis=0, keepdims=True)

    # Head: Linear(16, num_pred_classes) on the time-averaged features.
    logits_ref[...] = (jnp.dot(feat_ref[...], wf_ref[...],
                               preferred_element_type=jnp.float32)
                       + bf_ref[...])


# --------------------------------------------------------------------------
# Wrapper
# --------------------------------------------------------------------------
def small_fcn_forward(x_ncl, conv_params, final_params,
                      return_feature_vector=False):
    """x_ncl: PyTorch-layout input (B, C_in, L)."""
    # Channels-last inside the kernel so channels map to TPU lanes.
    x = jnp.transpose(x_ncl, (0, 2, 1)).astype(jnp.float32)   # (B, L, C_in)
    bsz, seq_len, _ = x.shape
    w_final, b_final = final_params
    n_feat, n_cls = w_final.shape

    c_max = max(int(w.shape[1]) for w, _ in conv_params)
    right_max = max(int(w.shape[0]) - 1 - (int(w.shape[0]) - 1) // 2
                    for w, _ in conv_params)
    l_buf = _PAD0 + seq_len + right_max
    l_buf = ((l_buf + 7) // 8) * 8        # keep the sublane dim 8-aligned

    flat_inputs = [x]
    for w, shift in conv_params:
        flat_inputs += [w, shift]
    flat_inputs += [w_final, b_final]

    kern = functools.partial(_small_fcn_kernel, len(conv_params))
    feat, logits = pl.pallas_call(
        kern,
        out_shape=(jax.ShapeDtypeStruct((bsz, n_feat), jnp.float32),
                   jax.ShapeDtypeStruct((bsz, n_cls), jnp.float32)),
        scratch_shapes=[pltpu.VMEM((bsz, l_buf, c_max), jnp.float32)],
    )(*flat_inputs)
    return feat if return_feature_vector else logits


# --------------------------------------------------------------------------
# Deterministic parameter construction (synthetic, no checkpoint load).
# Conv bias + eval-mode BatchNorm are pre-folded into (w, shift) here so the
# kernel epilogue is a single add + ReLU.
# --------------------------------------------------------------------------
def init_params(key, in_channels, num_classes):
    cfgs = [(in_channels, 16, 8), (16, 32, 5), (32, 32, 5), (32, 16, 5)]
    eps = 1e-5
    conv_params = []
    for cin, cout, ksize in cfgs:
        key, k1, k2, k3, k4, k5, k6 = jax.random.split(key, 7)
        w = 0.1 * jax.random.normal(k1, (ksize, cin, cout), jnp.float32)
        bias = 0.1 * jax.random.normal(k2, (1, cout), jnp.float32)
        gamma = 1.0 + 0.1 * jax.random.normal(k3, (1, cout), jnp.float32)
        beta = 0.1 * jax.random.normal(k4, (1, cout), jnp.float32)
        r_mean = 0.1 * jax.random.normal(k5, (1, cout), jnp.float32)
        r_var = jnp.abs(jax.random.normal(k6, (1, cout), jnp.float32)) + 0.5
        # y = (conv(x; w) + bias) * scale + shift  ==  conv(x; w*scale) + shift'
        scale = gamma / jnp.sqrt(r_var + eps)            # (1, cout)
        shift = beta - r_mean * scale                    # (1, cout)
        w_folded = w * scale[jnp.newaxis]                # (K, Cin, Cout)
        shift_folded = bias * scale + shift              # (1, cout)
        conv_params.append((w_folded, shift_folded))
    key, kf1, kf2 = jax.random.split(key, 3)
    w_final = 0.1 * jax.random.normal(kf1, (16, num_classes), jnp.float32)
    b_final = 0.1 * jax.random.normal(kf2, (1, num_classes), jnp.float32)
    return conv_params, (w_final, b_final)


if __name__ == "__main__":
    B, IN_CHANNELS, SEQ_LEN, NUM_CLASSES = 2, 4, 16, 3

    key = jax.random.PRNGKey(0)
    key, kx, kp = jax.random.split(key, 3)
    x = jax.random.normal(kx, (B, IN_CHANNELS, SEQ_LEN), jnp.float32)

    conv_params, final_params = init_params(kp, IN_CHANNELS, NUM_CLASSES)

    fwd = jax.jit(small_fcn_forward,
                  static_argnames=("return_feature_vector",))
    out = fwd(x, conv_params, final_params)
    jax.block_until_ready(out)
    assert out.shape == (B, NUM_CLASSES)

    feats = fwd(x, conv_params, final_params, return_feature_vector=True)
    jax.block_until_ready(feats)
    assert feats.shape == (B, 16)

    print("KERNEL_OK")
</pallas_src>

<mosaic_0001>
module attributes {stable_mosaic.version = 11 : i64} {
  func.func @_small_fcn_kernel(%arg0: memref<2x16x4xf32, #tpu.memory_space<vmem>>, %arg1: memref<8x4x16xf32, #tpu.memory_space<vmem>>, %arg2: memref<1x16xf32, #tpu.memory_space<vmem>>, %arg3: memref<5x16x32xf32, #tpu.memory_space<vmem>>, %arg4: memref<1x32xf32, #tpu.memory_space<vmem>>, %arg5: memref<5x32x32xf32, #tpu.memory_space<vmem>>, %arg6: memref<1x32xf32, #tpu.memory_space<vmem>>, %arg7: memref<5x32x16xf32, #tpu.memory_space<vmem>>, %arg8: memref<1x16xf32, #tpu.memory_space<vmem>>, %arg9: memref<16x3xf32, #tpu.memory_space<vmem>>, %arg10: memref<1x3xf32, #tpu.memory_space<vmem>>, %arg11: memref<2x16xf32, #tpu.memory_space<vmem>>, %arg12: memref<2x3xf32, #tpu.memory_space<vmem>>, %arg13: memref<2x32x32xf32, #tpu.memory_space<vmem>>) attributes {dimension_semantics = [], scalar_prefetch = 0 : i64, scratch_operands = 1 : i64, tpu.core_type = #tpu.core_type<tc>} {
    %cst = arith.constant 0.000000e+00 : f32
    %0 = vector.broadcast %cst : f32 to vector<2x32x32xf32>
    %c0 = arith.constant 0 : index
    %c0_0 = arith.constant 0 : index
    %c0_1 = arith.constant 0 : index
    %1 = vector.load %arg13[%c0, %c0_0, %c0_1] : memref<2x32x32xf32, #tpu.memory_space<vmem>>, vector<2x32x32xf32>
    tpu.vector_store %arg13[%c0, %c0_0, %c0_1], %0 {strides = array<i32>} : memref<2x32x32xf32, #tpu.memory_space<vmem>>, vector<2x32x32xf32>,
    %c0_2 = arith.constant 0 : index
    %c0_3 = arith.constant 0 : index
    %c0_4 = arith.constant 0 : index
    %2 = vector.load %arg0[%c0_2, %c0_3, %c0_4] : memref<2x16x4xf32, #tpu.memory_space<vmem>>, vector<1x16x4xf32>
    %3 = vector.shape_cast %2 : vector<1x16x4xf32> to vector<16x4xf32>
    %c0_5 = arith.constant 0 : index
    %c8 = arith.constant 8 : index
    %c0_6 = arith.constant 0 : index
    %4 = vector.load %arg13[%c0_5, %c8, %c0_6] : memref<2x32x32xf32, #tpu.memory_space<vmem>>, vector<1x16x4xf32>
    %5 = vector.shape_cast %4 : vector<1x16x4xf32> to vector<16x4xf32>
    %6 = vector.shape_cast %3 : vector<16x4xf32> to vector<1x16x4xf32>
    tpu.vector_store %arg13[%c0_5, %c8, %c0_6], %6 {strides = array<i32>} : memref<2x32x32xf32, #tpu.memory_space<vmem>>, vector<1x16x4xf32>,
    %cst_7 = arith.constant 0.000000e+00 : f32
    %7 = vector.broadcast %cst_7 : f32 to vector<16x16xf32>
    %c0_8 = arith.constant 0 : index
    %c5 = arith.constant 5 : index
    %c0_9 = arith.constant 0 : index
    %8 = vector.load %arg13[%c0_8, %c5, %c0_9] : memref<2x32x32xf32, #tpu.memory_space<vmem>>, vector<1x16x4xf32>
    %9 = vector.shape_cast %8 : vector<1x16x4xf32> to vector<16x4xf32>
    %c0_10 = arith.constant 0 : index
    %c0_11 = arith.constant 0 : index
    %c0_12 = arith.constant 0 : index
    %10 = vector.load %arg1[%c0_10, %c0_11, %c0_12] : memref<8x4x16xf32, #tpu.memory_space<vmem>>, vector<1x4x16xf32>
    %11 = vector.shape_cast %10 : vector<1x4x16xf32> to vector<4x16xf32>
    %cst_13 = arith.constant dense<0.000000e+00> : vector<16x16xf32>
    %12 = tpu.matmul %9, %11, %cst_13 {dimension_numbers = #tpu.dot_dimension_numbers<[1], [0], [0], [1], [0, 0, 1, 1], [], []>} : vector<16x4xf32>, vector<4x16xf32>, vector<16x16xf32> -> vector<16x16xf32>
    %13 = arith.addf %7, %12 : vector<16x16xf32>
    %c0_14 = arith.constant 0 : index
    %c6 = arith.constant 6 : index
    %c0_15 = arith.constant 0 : index
    %14 = vector.load %arg13[%c0_14, %c6, %c0_15] : memref<2x32x32xf32, #tpu.memory_space<vmem>>, vector<1x16x4xf32>
    %15 = vector.shape_cast %14 : vector<1x16x4xf32> to vector<16x4xf32>
    %c1 = arith.constant 1 : index
    %c0_16 = arith.constant 0 : index
    %c0_17 = arith.constant 0 : index
    %16 = vector.load %arg1[%c1, %c0_16, %c0_17] : memref<8x4x16xf32, #tpu.memory_space<vmem>>, vector<1x4x16xf32>
    %17 = vector.shape_cast %16 : vector<1x4x16xf32> to vector<4x16xf32>
    %cst_18 = arith.constant dense<0.000000e+00> : vector<16x16xf32>
    %18 = tpu.matmul %15, %17, %cst_18 {dimension_numbers = #tpu.dot_dimension_numbers<[1], [0], [0], [1], [0, 0, 1, 1], [], []>} : vector<16x4xf32>, vector<4x16xf32>, vector<16x16xf32> -> vector<16x16xf32>
    %19 = arith.addf %13, %18 : vector<16x16xf32>
    %c0_19 = arith.constant 0 : index
    %c7 = arith.constant 7 : index
    %c0_20 = arith.constant 0 : index
    %20 = vector.load %arg13[%c0_19, %c7, %c0_20] : memref<2x32x32xf32, #tpu.memory_space<vmem>>, vector<1x16x4xf32>
    %21 = vector.shape_cast %20 : vector<1x16x4xf32> to vector<16x4xf32>
    %c2 = arith.constant 2 : index
    %c0_21 = arith.constant 0 : index
    %c0_22 = arith.constant 0 : index
    %22 = vector.load %arg1[%c2, %c0_21, %c0_22] : memref<8x4x16xf32, #tpu.memory_space<vmem>>, vector<1x4x16xf32>
    %23 = vector.shape_cast %22 : vector<1x4x16xf32> to vector<4x16xf32>
    %cst_23 = arith.constant dense<0.000000e+00> : vector<16x16xf32>
    %24 = tpu.matmul %21, %23, %cst_23 {dimension_numbers = #tpu.dot_dimension_numbers<[1], [0], [0], [1], [0, 0, 1, 1], [], []>} : vector<16x4xf32>, vector<4x16xf32>, vector<16x16xf32> -> vector<16x16xf32>
    %25 = arith.addf %19, %24 : vector<16x16xf32>
    %c0_24 = arith.constant 0 : index
    %c8_25 = arith.constant 8 : index
    %c0_26 = arith.constant 0 : index
    %26 = vector.load %arg13[%c0_24, %c8_25, %c0_26] : memref<2x32x32xf32, #tpu.memory_space<vmem>>, vector<1x16x4xf32>
    %27 = vector.shape_cast %26 : vector<1x16x4xf32> to vector<16x4xf32>
    %c3 = arith.constant 3 : index
    %c0_27 = arith.constant 0 : index
    %c0_28 = arith.constant 0 : index
    %28 = vector.load %arg1[%c3, %c0_27, %c0_28] : memref<8x4x16xf32, #tpu.memory_space<vmem>>, vector<1x4x16xf32>
    %29 = vector.shape_cast %28 : vector<1x4x16xf32> to vector<4x16xf32>
    %cst_29 = arith.constant dense<0.000000e+00> : vector<16x16xf32>
    %30 = tpu.matmul %27, %29, %cst_29 {dimension_numbers = #tpu.dot_dimension_numbers<[1], [0], [0], [1], [0, 0, 1, 1], [], []>} : vector<16x4xf32>, vector<4x16xf32>, vector<16x16xf32> -> vector<16x16xf32>
    %31 = arith.addf %25, %30 : vector<16x16xf32>
    %c0_30 = arith.constant 0 : index
    %c9 = arith.constant 9 : index
    %c0_31 = arith.constant 0 : index
    %32 = vector.load %arg13[%c0_30, %c9, %c0_31] : memref<2x32x32xf32, #tpu.memory_space<vmem>>, vector<1x16x4xf32>
    %33 = vector.shape_cast %32 : vector<1x16x4xf32> to vector<16x4xf32>
    %c4 = arith.constant 4 : index
    %c0_32 = arith.constant 0 : index
    %c0_33 = arith.constant 0 : index
    %34 = vector.load %arg1[%c4, %c0_32, %c0_33] : memref<8x4x16xf32, #tpu.memory_space<vmem>>, vector<1x4x16xf32>
    %35 = vector.shape_cast %34 : vector<1x4x16xf32> to vector<4x16xf32>
    %cst_34 = arith.constant dense<0.000000e+00> : vector<16x16xf32>
    %36 = tpu.matmul %33, %35, %cst_34 {dimension_numbers = #tpu.dot_dimension_numbers<[1], [0], [0], [1], [0, 0, 1, 1], [], []>} : vector<16x4xf32>, vector<4x16xf32>, vector<16x16xf32> -> vector<16x16xf32>
    %37 = arith.addf %31, %36 : vector<16x16xf32>
    %c0_35 = arith.constant 0 : index
    %c10 = arith.constant 10 : index
    %c0_36 = arith.constant 0 : index
    %38 = vector.load %arg13[%c0_35, %c10, %c0_36] : memref<2x32x32xf32, #tpu.memory_space<vmem>>, vector<1x16x4xf32>
    %39 = vector.shape_cast %38 : vector<1x16x4xf32> to vector<16x4xf32>
    %c5_37 = arith.constant 5 : index
    %c0_38 = arith.constant 0 : index
    %c0_39 = arith.constant 0 : index
    %40 = vector.load %arg1[%c5_37, %c0_38, %c0_39] : memref<8x4x16xf32, #tpu.memory_space<vmem>>, vector<1x4x16xf32>
    %41 = vector.shape_cast %40 : vector<1x4x16xf32> to vector<4x16xf32>
    %cst_40 = arith.constant dense<0.000000e+00> : vector<16x16xf32>
    %42 = tpu.matmul %39, %41, %cst_40 {dimension_numbers = #tpu.dot_dimension_numbers<[1], [0], [0], [1], [0, 0, 1, 1], [], []>} : vector<16x4xf32>, vector<4x16xf32>, vector<16x16xf32> -> vector<16x16xf32>
    %43 = arith.addf %37, %42 : vector<16x16xf32>
    %c0_41 = arith.constant 0 : index
    %c11 = arith.constant 11 : index
    %c0_42 = arith.constant 0 : index
    %44 = vector.load %arg13[%c0_41, %c11, %c0_42] : memref<2x32x32xf32, #tpu.memory_space<vmem>>, vector<1x16x4xf32>
    %45 = vector.shape_cast %44 : vector<1x16x4xf32> to vector<16x4xf32>
    %c6_43 = arith.constant 6 : index
    %c0_44 = arith.constant 0 : index
    %c0_45 = arith.constant 0 : index
    %46 = vector.load %arg1[%c6_43, %c0_44, %c0_45] : memref<8x4x16xf32, #tpu.memory_space<vmem>>, vector<1x4x16xf32>
    %47 = vector.shape_cast %46 : vector<1x4x16xf32> to vector<4x16xf32>
    %cst_46 = arith.constant dense<0.000000e+00> : vector<16x16xf32>
    %48 = tpu.matmul %45, %47, %cst_46 {dimension_numbers = #tpu.dot_dimension_numbers<[1], [0], [0], [1], [0, 0, 1, 1], [], []>} : vector<16x4xf32>, vector<4x16xf32>, vector<16x16xf32> -> vector<16x16xf32>
    %49 = arith.addf %43, %48 : vector<16x16xf32>
    %c0_47 = arith.constant 0 : index
    %c12 = arith.constant 12 : index
    %c0_48 = arith.constant 0 : index
    %50 = vector.load %arg13[%c0_47, %c12, %c0_48] : memref<2x32x32xf32, #tpu.memory_space<vmem>>, vector<1x16x4xf32>
    %51 = vector.shape_cast %50 : vector<1x16x4xf32> to vector<16x4xf32>
    %c7_49 = arith.constant 7 : index
    %c0_50 = arith.constant 0 : index
    %c0_51 = arith.constant 0 : index
    %52 = vector.load %arg1[%c7_49, %c0_50, %c0_51] : memref<8x4x16xf32, #tpu.memory_space<vmem>>, vector<1x4x16xf32>
    %53 = vector.shape_cast %52 : vector<1x4x16xf32> to vector<4x16xf32>
    %cst_52 = arith.constant dense<0.000000e+00> : vector<16x16xf32>
    %54 = tpu.matmul %51, %53, %cst_52 {dimension_numbers = #tpu.dot_dimension_numbers<[1], [0], [0], [1], [0, 0, 1, 1], [], []>} : vector<16x4xf32>, vector<4x16xf32>, vector<16x16xf32> -> vector<16x16xf32>
    %55 = arith.addf %49, %54 : vector<16x16xf32>
    %c0_53 = arith.constant 0 : index
    %c0_54 = arith.constant 0 : index
    %56 = vector.load %arg2[%c0_53, %c0_54] : memref<1x16xf32, #tpu.memory_space<vmem>>, vector<1x16xf32>
    %57 = vector.broadcast %56 : vector<1x16xf32> to vector<16x16xf32>
    %58 = arith.addf %55, %57 : vector<16x16xf32>
    %cst_55 = arith.constant 0.000000e+00 : f32
    %59 = vector.broadcast %cst_55 : f32 to vector<16x16xf32>
    %60 = arith.maximumf %58, %59 : vector<16x16xf32>
    %c0_56 = arith.constant 0 : index
    %c8_57 = arith.constant 8 : index
    %c0_58 = arith.constant 0 : index
    %61 = vector.load %arg13[%c0_56, %c8_57, %c0_58] : memref<2x32x32xf32, #tpu.memory_space<vmem>>, vector<1x16x16xf32>
    %62 = vector.shape_cast %61 : vector<1x16x16xf32> to vector<16x16xf32>
    %63 = vector.shape_cast %60 : vector<16x16xf32> to vector<1x16x16xf32>
    tpu.vector_store %arg13[%c0_56, %c8_57, %c0_58], %63 {strides = array<i32>} : memref<2x32x32xf32, #tpu.memory_space<vmem>>, vector<1x16x16xf32>,
    %cst_59 = arith.constant 0.000000e+00 : f32
    %64 = vector.broadcast %cst_59 : f32 to vector<16x32xf32>
    %c0_60 = arith.constant 0 : index
    %c6_61 = arith.constant 6 : index
    %c0_62 = arith.constant 0 : index
    %65 = vector.load %arg13[%c0_60, %c6_61, %c0_62] : memref<2x32x32xf32, #tpu.memory_space<vmem>>, vector<1x16x16xf32>
    %66 = vector.shape_cast %65 : vector<1x16x16xf32> to vector<16x16xf32>
    %c0_63 = arith.constant 0 : index
    %c0_64 = arith.constant 0 : index
    %c0_65 = arith.constant 0 : index
    %67 = vector.load %arg3[%c0_63, %c0_64, %c0_65] : memref<5x16x32xf32, #tpu.memory_space<vmem>>, vector<1x16x32xf32>
    %68 = vector.shape_cast %67 : vector<1x16x32xf32> to vector<16x32xf32>
    %cst_66 = arith.constant dense<0.000000e+00> : vector<16x32xf32>
    %69 = tpu.matmul %66, %68, %cst_66 {dimension_numbers = #tpu.dot_dimension_numbers<[1], [0], [0], [1], [0, 0, 1, 1], [], []>} : vector<16x16xf32>, vector<16x32xf32>, vector<16x32xf32> -> vector<16x32xf32>
    %70 = arith.addf %64, %69 : vector<16x32xf32>
    %c0_67 = arith.constant 0 : index
    %c7_68 = arith.constant 7 : index
    %c0_69 = arith.constant 0 : index
    %71 = vector.load %arg13[%c0_67, %c7_68, %c0_69] : memref<2x32x32xf32, #tpu.memory_space<vmem>>, vector<1x16x16xf32>
    %72 = vector.shape_cast %71 : vector<1x16x16xf32> to vector<16x16xf32>
    %c1_70 = arith.constant 1 : index
    %c0_71 = arith.constant 0 : index
    %c0_72 = arith.constant 0 : index
    %73 = vector.load %arg3[%c1_70, %c0_71, %c0_72] : memref<5x16x32xf32, #tpu.memory_space<vmem>>, vector<1x16x32xf32>
    %74 = vector.shape_cast %73 : vector<1x16x32xf32> to vector<16x32xf32>
    %cst_73 = arith.constant dense<0.000000e+00> : vector<16x32xf32>
    %75 = tpu.matmul %72, %74, %cst_73 {dimension_numbers = #tpu.dot_dimension_numbers<[1], [0], [0], [1], [0, 0, 1, 1], [], []>} : vector<16x16xf32>, vector<16x32xf32>, vector<16x32xf32> -> vector<16x32xf32>
    %76 = arith.addf %70, %75 : vector<16x32xf32>
    %c0_74 = arith.constant 0 : index
    %c8_75 = arith.constant 8 : index
    %c0_76 = arith.constant 0 : index
    %77 = vector.load %arg13[%c0_74, %c8_75, %c0_76] : memref<2x32x32xf32, #tpu.memory_space<vmem>>, vector<1x16x16xf32>
    %78 = vector.shape_cast %77 : vector<1x16x16xf32> to vector<16x16xf32>
    %c2_77 = arith.constant 2 : index
    %c0_78 = arith.constant 0 : index
    %c0_79 = arith.constant 0 : index
    %79 = vector.load %arg3[%c2_77, %c0_78, %c0_79] : memref<5x16x32xf32, #tpu.memory_space<vmem>>, vector<1x16x32xf32>
    %80 = vector.shape_cast %79 : vector<1x16x32xf32> to vector<16x32xf32>
    %cst_80 = arith.constant dense<0.000000e+00> : vector<16x32xf32>
    %81 = tpu.matmul %78, %80, %cst_80 {dimension_numbers = #tpu.dot_dimension_numbers<[1], [0], [0], [1], [0, 0, 1, 1], [], []>} : vector<16x16xf32>, vector<16x32xf32>, vector<16x32xf32> -> vector<16x32xf32>
    %82 = arith.addf %76, %81 : vector<16x32xf32>
    %c0_81 = arith.constant 0 : index
    %c9_82 = arith.constant 9 : index
    %c0_83 = arith.constant 0 : index
    %83 = vector.load %arg13[%c0_81, %c9_82, %c0_83] : memref<2x32x32xf32, #tpu.memory_space<vmem>>, vector<1x16x16xf32>
    %84 = vector.shape_cast %83 : vector<1x16x16xf32> to vector<16x16xf32>
    %c3_84 = arith.constant 3 : index
    %c0_85 = arith.constant 0 : index
    %c0_86 = arith.constant 0 : index
    %85 = vector.load %arg3[%c3_84, %c0_85, %c0_86] : memref<5x16x32xf32, #tpu.memory_space<vmem>>, vector<1x16x32xf32>
    %86 = vector.shape_cast %85 : vector<1x16x32xf32> to vector<16x32xf32>
    %cst_87 = arith.constant dense<0.000000e+00> : vector<16x32xf32>
    %87 = tpu.matmul %84, %86, %cst_87 {dimension_numbers = #tpu.dot_dimension_numbers<[1], [0], [0], [1], [0, 0, 1, 1], [], []>} : vector<16x16xf32>, vector<16x32xf32>, vector<16x32xf32> -> vector<16x32xf32>
    %88 = arith.addf %82, %87 : vector<16x32xf32>
    %c0_88 = arith.constant 0 : index
    %c10_89 = arith.constant 10 : index
    %c0_90 = arith.constant 0 : index
    %89 = vector.load %arg13[%c0_88, %c10_89, %c0_90] : memref<2x32x32xf32, #tpu.memory_space<vmem>>, vector<1x16x16xf32>
    %90 = vector.shape_cast %89 : vector<1x16x16xf32> to vector<16x16xf32>
    %c4_91 = arith.constant 4 : index
    %c0_92 = arith.constant 0 : index
    %c0_93 = arith.constant 0 : index
    %91 = vector.load %arg3[%c4_91, %c0_92, %c0_93] : memref<5x16x32xf32, #tpu.memory_space<vmem>>, vector<1x16x32xf32>
    %92 = vector.shape_cast %91 : vector<1x16x32xf32> to vector<16x32xf32>
    %cst_94 = arith.constant dense<0.000000e+00> : vector<16x32xf32>
    %93 = tpu.matmul %90, %92, %cst_94 {dimension_numbers = #tpu.dot_dimension_numbers<[1], [0], [0], [1], [0, 0, 1, 1], [], []>} : vector<16x16xf32>, vector<16x32xf32>, vector<16x32xf32> -> vector<16x32xf32>
    %94 = arith.addf %88, %93 : vector<16x32xf32>
    %c0_95 = arith.constant 0 : index
    %c0_96 = arith.constant 0 : index
    %95 = vector.load %arg4[%c0_95, %c0_96] : memref<1x32xf32, #tpu.memory_space<vmem>>, vector<1x32xf32>
    %96 = vector.broadcast %95 : vector<1x32xf32> to vector<16x32xf32>
    %97 = arith.addf %94, %96 : vector<16x32xf32>
    %cst_97 = arith.constant 0.000000e+00 : f32
    %98 = vector.broadcast %cst_97 : f32 to vector<16x32xf32>
    %99 = arith.maximumf %97, %98 : vector<16x32xf32>
    %c0_98 = arith.constant 0 : index
    %c8_99 = arith.constant 8 : index
    %c0_100 = arith.constant 0 : index
    %100 = vector.load %arg13[%c0_98, %c8_99, %c0_100] : memref<2x32x32xf32, #tpu.memory_space<vmem>>, vector<1x16x32xf32>
    %101 = vector.shape_cast %100 : vector<1x16x32xf32> to vector<16x32xf32>
    %102 = vector.shape_cast %99 : vector<16x32xf32> to vector<1x16x32xf32>
    tpu.vector_store %arg13[%c0_98, %c8_99, %c0_100], %102 {strides = array<i32>} : memref<2x32x32xf32, #tpu.memory_space<vmem>>, vector<1x16x32xf32>,
    %cst_101 = arith.constant 0.000000e+00 : f32
    %103 = vector.broadcast %cst_101 : f32 to vector<16x32xf32>
    %c0_102 = arith.constant 0 : index
    %c6_103 = arith.constant 6 : index
    %c0_104 = arith.constant 0 : index
    %104 = vector.load %arg13[%c0_102, %c6_103, %c0_104] : memref<2x32x32xf32, #tpu.memory_space<vmem>>, vector<1x16x32xf32>
    %105 = vector.shape_cast %104 : vector<1x16x32xf32> to vector<16x32xf32>
    %c0_105 = arith.constant 0 : index
    %c0_106 = arith.constant 0 : index
    %c0_107 = arith.constant 0 : index
    %106 = vector.load %arg5[%c0_105, %c0_106, %c0_107] : memref<5x32x32xf32, #tpu.memory_space<vmem>>, vector<1x32x32xf32>
    %107 = vector.shape_cast %106 : vector<1x32x32xf32> to vector<32x32xf32>
    %cst_108 = arith.constant dense<0.000000e+00> : vector<16x32xf32>
    %108 = tpu.matmul %105, %107, %cst_108 {dimension_numbers = #tpu.dot_dimension_numbers<[1], [0], [0], [1], [0, 0, 1, 1], [], []>} : vector<16x32xf32>, vector<32x32xf32>, vector<16x32xf32> -> vector<16x32xf32>
    %109 = arith.addf %103, %108 : vector<16x32xf32>
    %c0_109 = arith.constant 0 : index
    %c7_110 = arith.constant 7 : index
    %c0_111 = arith.constant 0 : index
    %110 = vector.load %arg13[%c0_109, %c7_110, %c0_111] : memref<2x32x32xf32, #tpu.memory_space<vmem>>, vector<1x16x32xf32>
    %111 = vector.shape_cast %110 : vector<1x16x32xf32> to vector<16x32xf32>
    %c1_112 = arith.constant 1 : index
    %c0_113 = arith.constant 0 : index
    %c0_114 = arith.constant 0 : index
    %112 = vector.load %arg5[%c1_112, %c0_113, %c0_114] : memref<5x32x32xf32, #tpu.memory_space<vmem>>, vector<1x32x32xf32>
    %113 = vector.shape_cast %112 : vector<1x32x32xf32> to vector<32x32xf32>
    %cst_115 = arith.constant dense<0.000000e+00> : vector<16x32xf32>
    %114 = tpu.matmul %111, %113, %cst_115 {dimension_numbers = #tpu.dot_dimension_numbers<[1], [0], [0], [1], [0, 0, 1, 1], [], []>} : vector<16x32xf32>, vector<32x32xf32>, vector<16x32xf32> -> vector<16x32xf32>
    %115 = arith.addf %109, %114 : vector<16x32xf32>
    %c0_116 = arith.constant 0 : index
    %c8_117 = arith.constant 8 : index
    %c0_118 = arith.constant 0 : index
    %116 = vector.load %arg13[%c0_116, %c8_117, %c0_118] : memref<2x32x32xf32, #tpu.memory_space<vmem>>, vector<1x16x32xf32>
    %117 = vector.shape_cast %116 : vector<1x16x32xf32> to vector<16x32xf32>
    %c2_119 = arith.constant 2 : index
    %c0_120 = arith.constant 0 : index
    %c0_121 = arith.constant 0 : index
    %118 = vector.load %arg5[%c2_119, %c0_120, %c0_121] : memref<5x32x32xf32, #tpu.memory_space<vmem>>, vector<1x32x32xf32>
    %119 = vector.shape_cast %118 : vector<1x32x32xf32> to vector<32x32xf32>
    %cst_122 = arith.constant dense<0.000000e+00> : vector<16x32xf32>
    %120 = tpu.matmul %117, %119, %cst_122 {dimension_numbers = #tpu.dot_dimension_numbers<[1], [0], [0], [1], [0, 0, 1, 1], [], []>} : vector<16x32xf32>, vector<32x32xf32>, vector<16x32xf32> -> vector<16x32xf32>
    %121 = arith.addf %115, %120 : vector<16x32xf32>
    %c0_123 = arith.constant 0 : index
    %c9_124 = arith.constant 9 : index
    %c0_125 = arith.constant 0 : index
    %122 = vector.load %arg13[%c0_123, %c9_124, %c0_125] : memref<2x32x32xf32, #tpu.memory_space<vmem>>, vector<1x16x32xf32>
    %123 = vector.shape_cast %122 : vector<1x16x32xf32> to vector<16x32xf32>
    %c3_126 = arith.constant 3 : index
    %c0_127 = arith.constant 0 : index
    %c0_128 = arith.constant 0 : index
    %124 = vector.load %arg5[%c3_126, %c0_127, %c0_128] : memref<5x32x32xf32, #tpu.memory_space<vmem>>, vector<1x32x32xf32>
    %125 = vector.shape_cast %124 : vector<1x32x32xf32> to vector<32x32xf32>
    %cst_129 = arith.constant dense<0.000000e+00> : vector<16x32xf32>
    %126 = tpu.matmul %123, %125, %cst_129 {dimension_numbers = #tpu.dot_dimension_numbers<[1], [0], [0], [1], [0, 0, 1, 1], [], []>} : vector<16x32xf32>, vector<32x32xf32>, vector<16x32xf32> -> vector<16x32xf32>
    %127 = arith.addf %121, %126 : vector<16x32xf32>
    %c0_130 = arith.constant 0 : index
    %c10_131 = arith.constant 10 : index
    %c0_132 = arith.constant 0 : index
    %128 = vector.load %arg13[%c0_130, %c10_131, %c0_132] : memref<2x32x32xf32, #tpu.memory_space<vmem>>, vector<1x16x32xf32>
    %129 = vector.shape_cast %128 : vector<1x16x32xf32> to vector<16x32xf32>
    %c4_133 = arith.constant 4 : index
    %c0_134 = arith.constant 0 : index
    %c0_135 = arith.constant 0 : index
    %130 = vector.load %arg5[%c4_133, %c0_134, %c0_135] : memref<5x32x32xf32, #tpu.memory_space<vmem>>, vector<1x32x32xf32>
    %131 = vector.shape_cast %130 : vector<1x32x32xf32> to vector<32x32xf32>
    %cst_136 = arith.constant dense<0.000000e+00> : vector<16x32xf32>
    %132 = tpu.matmul %129, %131, %cst_136 {dimension_numbers = #tpu.dot_dimension_numbers<[1], [0], [0], [1], [0, 0, 1, 1], [], []>} : vector<16x32xf32>, vector<32x32xf32>, vector<16x32xf32> -> vector<16x32xf32>
    %133 = arith.addf %127, %132 : vector<16x32xf32>
    %c0_137 = arith.constant 0 : index
    %c0_138 = arith.constant 0 : index
    %134 = vector.load %arg6[%c0_137, %c0_138] : memref<1x32xf32, #tpu.memory_space<vmem>>, vector<1x32xf32>
    %135 = vector.broadcast %134 : vector<1x32xf32> to vector<16x32xf32>
    %136 = arith.addf %133, %135 : vector<16x32xf32>
    %cst_139 = arith.constant 0.000000e+00 : f32
    %137 = vector.broadcast %cst_139 : f32 to vector<16x32xf32>
    %138 = arith.maximumf %136, %137 : vector<16x32xf32>
    %c0_140 = arith.constant 0 : index
    %c8_141 = arith.constant 8 : index
    %c0_142 = arith.constant 0 : index
    %139 = vector.load %arg13[%c0_140, %c8_141, %c0_142] : memref<2x32x32xf32, #tpu.memory_space<vmem>>, vector<1x16x32xf32>
    %140 = vector.shape_cast %139 : vector<1x16x32xf32> to vector<16x32xf32>
    %141 = vector.shape_cast %138 : vector<16x32xf32> to vector<1x16x32xf32>
    tpu.vector_store %arg13[%c0_140, %c8_141, %c0_142], %141 {strides = array<i32>} : memref<2x32x32xf32, #tpu.memory_space<vmem>>, vector<1x16x32xf32>,
    %cst_143 = arith.constant 0.000000e+00 : f32
    %142 = vector.broadcast %cst_143 : f32 to vector<16x16xf32>
    %c0_144 = arith.constant 0 : index
    %c6_145 = arith.constant 6 : index
    %c0_146 = arith.constant 0 : index
    %143 = vector.load %arg13[%c0_144, %c6_145, %c0_146] : memref<2x32x32xf32, #tpu.memory_space<vmem>>, vector<1x16x32xf32>
    %144 = vector.shape_cast %143 : vector<1x16x32xf32> to vector<16x32xf32>
    %c0_147 = arith.constant 0 : index
    %c0_148 = arith.constant 0 : index
    %c0_149 = arith.constant 0 : index
    %145 = vector.load %arg7[%c0_147, %c0_148, %c0_149] : memref<5x32x16xf32, #tpu.memory_space<vmem>>, vector<1x32x16xf32>
    %146 = vector.shape_cast %145 : vector<1x32x16xf32> to vector<32x16xf32>
    %cst_150 = arith.constant dense<0.000000e+00> : vector<16x16xf32>
    %147 = tpu.matmul %144, %146, %cst_150 {dimension_numbers = #tpu.dot_dimension_numbers<[1], [0], [0], [1], [0, 0, 1, 1], [], []>} : vector<16x32xf32>, vector<32x16xf32>, vector<16x16xf32> -> vector<16x16xf32>
    %148 = arith.addf %142, %147 : vector<16x16xf32>
    %c0_151 = arith.constant 0 : index
    %c7_152 = arith.constant 7 : index
    %c0_153 = arith.constant 0 : index
    %149 = vector.load %arg13[%c0_151, %c7_152, %c0_153] : memref<2x32x32xf32, #tpu.memory_space<vmem>>, vector<1x16x32xf32>
    %150 = vector.shape_cast %149 : vector<1x16x32xf32> to vector<16x32xf32>
    %c1_154 = arith.constant 1 : index
    %c0_155 = arith.constant 0 : index
    %c0_156 = arith.constant 0 : index
    %151 = vector.load %arg7[%c1_154, %c0_155, %c0_156] : memref<5x32x16xf32, #tpu.memory_space<vmem>>, vector<1x32x16xf32>
    %152 = vector.shape_cast %151 : vector<1x32x16xf32> to vector<32x16xf32>
    %cst_157 = arith.constant dense<0.000000e+00> : vector<16x16xf32>
    %153 = tpu.matmul %150, %152, %cst_157 {dimension_numbers = #tpu.dot_dimension_numbers<[1], [0], [0], [1], [0, 0, 1, 1], [], []>} : vector<16x32xf32>, vector<32x16xf32>, vector<16x16xf32> -> vector<16x16xf32>
    %154 = arith.addf %148, %153 : vector<16x16xf32>
    %c0_158 = arith.constant 0 : index
    %c8_159 = arith.constant 8 : index
    %c0_160 = arith.constant 0 : index
    %155 = vector.load %arg13[%c0_158, %c8_159, %c0_160] : memref<2x32x32xf32, #tpu.memory_space<vmem>>, vector<1x16x32xf32>
    %156 = vector.shape_cast %155 : vector<1x16x32xf32> to vector<16x32xf32>
    %c2_161 = arith.constant 2 : index
    %c0_162 = arith.constant 0 : index
    %c0_163 = arith.constant 0 : index
    %157 = vector.load %arg7[%c2_161, %c0_162, %c0_163] : memref<5x32x16xf32, #tpu.memory_space<vmem>>, vector<1x32x16xf32>
    %158 = vector.shape_cast %157 : vector<1x32x16xf32> to vector<32x16xf32>
    %cst_164 = arith.constant dense<0.000000e+00> : vector<16x16xf32>
    %159 = tpu.matmul %156, %158, %cst_164 {dimension_numbers = #tpu.dot_dimension_numbers<[1], [0], [0], [1], [0, 0, 1, 1], [], []>} : vector<16x32xf32>, vector<32x16xf32>, vector<16x16xf32> -> vector<16x16xf32>
    %160 = arith.addf %154, %159 : vector<16x16xf32>
    %c0_165 = arith.constant 0 : index
    %c9_166 = arith.constant 9 : index
    %c0_167 = arith.constant 0 : index
    %161 = vector.load %arg13[%c0_165, %c9_166, %c0_167] : memref<2x32x32xf32, #tpu.memory_space<vmem>>, vector<1x16x32xf32>
    %162 = vector.shape_cast %161 : vector<1x16x32xf32> to vector<16x32xf32>
    %c3_168 = arith.constant 3 : index
    %c0_169 = arith.constant 0 : index
    %c0_170 = arith.constant 0 : index
    %163 = vector.load %arg7[%c3_168, %c0_169, %c0_170] : memref<5x32x16xf32, #tpu.memory_space<vmem>>, vector<1x32x16xf32>
    %164 = vector.shape_cast %163 : vector<1x32x16xf32> to vector<32x16xf32>
    %cst_171 = arith.constant dense<0.000000e+00> : vector<16x16xf32>
    %165 = tpu.matmul %162, %164, %cst_171 {dimension_numbers = #tpu.dot_dimension_numbers<[1], [0], [0], [1], [0, 0, 1, 1], [], []>} : vector<16x32xf32>, vector<32x16xf32>, vector<16x16xf32> -> vector<16x16xf32>
    %166 = arith.addf %160, %165 : vector<16x16xf32>
    %c0_172 = arith.constant 0 : index
    %c10_173 = arith.constant 10 : index
    %c0_174 = arith.constant 0 : index
    %167 = vector.load %arg13[%c0_172, %c10_173, %c0_174] : memref<2x32x32xf32, #tpu.memory_space<vmem>>, vector<1x16x32xf32>
    %168 = vector.shape_cast %167 : vector<1x16x32xf32> to vector<16x32xf32>
    %c4_175 = arith.constant 4 : index
    %c0_176 = arith.constant 0 : index
    %c0_177 = arith.constant 0 : index
    %169 = vector.load %arg7[%c4_175, %c0_176, %c0_177] : memref<5x32x16xf32, #tpu.memory_space<vmem>>, vector<1x32x16xf32>
    %170 = vector.shape_cast %169 : vector<1x32x16xf32> to vector<32x16xf32>
    %cst_178 = arith.constant dense<0.000000e+00> : vector<16x16xf32>
    %171 = tpu.matmul %168, %170, %cst_178 {dimension_numbers = #tpu.dot_dimension_numbers<[1], [0], [0], [1], [0, 0, 1, 1], [], []>} : vector<16x32xf32>, vector<32x16xf32>, vector<16x16xf32> -> vector<16x16xf32>
    %172 = arith.addf %166, %171 : vector<16x16xf32>
    %c0_179 = arith.constant 0 : index
    %c0_180 = arith.constant 0 : index
    %173 = vector.load %arg8[%c0_179, %c0_180] : memref<1x16xf32, #tpu.memory_space<vmem>>, vector<1x16xf32>
    %174 = vector.broadcast %173 : vector<1x16xf32> to vector<16x16xf32>
    %175 = arith.addf %172, %174 : vector<16x16xf32>
    %cst_181 = arith.constant 0.000000e+00 : f32
    %176 = vector.broadcast %cst_181 : f32 to vector<16x16xf32>
    %177 = arith.maximumf %175, %176 : vector<16x16xf32>
    %cst_182 = arith.constant dense<0.000000e+00> : vector<16xf32>
    %178 = vector.multi_reduction <add>, %177, %cst_182 [0] : vector<16x16xf32> to vector<16xf32>
    %179 = vector.shape_cast %178 : vector<16xf32> to vector<1x16xf32>
    %cst_183 = arith.constant 1.600000e+01 : f32
    %180 = vector.broadcast %cst_183 : f32 to vector<1x16xf32>
    %181 = arith.divf %179, %180 : vector<1x16xf32>
    %c0_184 = arith.constant 0 : index
    %c0_185 = arith.constant 0 : index
    %182 = vector.load %arg11[%c0_184, %c0_185] : memref<2x16xf32, #tpu.memory_space<vmem>>, vector<1x16xf32>
    tpu.vector_store %arg11[%c0_184, %c0_185], %181 {strides = array<i32>} : memref<2x16xf32, #tpu.memory_space<vmem>>, vector<1x16xf32>,
    %c1_186 = arith.constant 1 : index
    %c0_187 = arith.constant 0 : index
    %c0_188 = arith.constant 0 : index
    %183 = vector.load %arg0[%c1_186, %c0_187, %c0_188] : memref<2x16x4xf32, #tpu.memory_space<vmem>>, vector<1x16x4xf32>
    %184 = vector.shape_cast %183 : vector<1x16x4xf32> to vector<16x4xf32>
    %c1_189 = arith.constant 1 : index
    %c8_190 = arith.constant 8 : index
    %c0_191 = arith.constant 0 : index
    %185 = vector.load %arg13[%c1_189, %c8_190, %c0_191] : memref<2x32x32xf32, #tpu.memory_space<vmem>>, vector<1x16x4xf32>
    %186 = vector.shape_cast %185 : vector<1x16x4xf32> to vector<16x4xf32>
    %187 = vector.shape_cast %184 : vector<16x4xf32> to vector<1x16x4xf32>
    tpu.vector_store %arg13[%c1_189, %c8_190, %c0_191], %187 {strides = array<i32>} : memref<2x32x32xf32, #tpu.memory_space<vmem>>, vector<1x16x4xf32>,
    %cst_192 = arith.constant 0.000000e+00 : f32
    %188 = vector.broadcast %cst_192 : f32 to vector<16x16xf32>
    %c1_193 = arith.constant 1 : index
    %c5_194 = arith.constant 5 : index
    %c0_195 = arith.constant 0 : index
    %189 = vector.load %arg13[%c1_193, %c5_194, %c0_195] : memref<2x32x32xf32, #tpu.memory_space<vmem>>, vector<1x16x4xf32>
    %190 = vector.shape_cast %189 : vector<1x16x4xf32> to vector<16x4xf32>
    %c0_196 = arith.constant 0 : index
    %c0_197 = arith.constant 0 : index
    %c0_198 = arith.constant 0 : index
    %191 = vector.load %arg1[%c0_196, %c0_197, %c0_198] : memref<8x4x16xf32, #tpu.memory_space<vmem>>, vector<1x4x16xf32>
    %192 = vector.shape_cast %191 : vector<1x4x16xf32> to vector<4x16xf32>
    %cst_199 = arith.constant dense<0.000000e+00> : vector<16x16xf32>
    %193 = tpu.matmul %190, %192, %cst_199 {dimension_numbers = #tpu.dot_dimension_numbers<[1], [0], [0], [1], [0, 0, 1, 1], [], []>} : vector<16x4xf32>, vector<4x16xf32>, vector<16x16xf32> -> vector<16x16xf32>
    %194 = arith.addf %188, %193 : vector<16x16xf32>
    %c1_200 = arith.constant 1 : index
    %c6_201 = arith.constant 6 : index
    %c0_202 = arith.constant 0 : index
    %195 = vector.load %arg13[%c1_200, %c6_201, %c0_202] : memref<2x32x32xf32, #tpu.memory_space<vmem>>, vector<1x16x4xf32>
    %196 = vector.shape_cast %195 : vector<1x16x4xf32> to vector<16x4xf32>
    %c1_203 = arith.constant 1 : index
    %c0_204 = arith.constant 0 : index
    %c0_205 = arith.constant 0 : index
    %197 = vector.load %arg1[%c1_203, %c0_204, %c0_205] : memref<8x4x16xf32, #tpu.memory_space<vmem>>, vector<1x4x16xf32>
    %198 = vector.shape_cast %197 : vector<1x4x16xf32> to vector<4x16xf32>
    %cst_206 = arith.constant dense<0.000000e+00> : vector<16x16xf32>
    %199 = tpu.matmul %196, %198, %cst_206 {dimension_numbers = #tpu.dot_dimension_numbers<[1], [0], [0], [1], [0, 0, 1, 1], [], []>} : vector<16x4xf32>, vector<4x16xf32>, vector<16x16xf32> -> vector<16x16xf32>
    %200 = arith.addf %194, %199 : vector<16x16xf32>
    %c1_207 = arith.constant 1 : index
    %c7_208 = arith.constant 7 : index
    %c0_209 = arith.constant 0 : index
    %201 = vector.load %arg13[%c1_207, %c7_208, %c0_209] : memref<2x32x32xf32, #tpu.memory_space<vmem>>, vector<1x16x4xf32>
    %202 = vector.shape_cast %201 : vector<1x16x4xf32> to vector<16x4xf32>
    %c2_210 = arith.constant 2 : index
    %c0_211 = arith.constant 0 : index
    %c0_212 = arith.constant 0 : index
    %203 = vector.load %arg1[%c2_210, %c0_211, %c0_212] : memref<8x4x16xf32, #tpu.memory_space<vmem>>, vector<1x4x16xf32>
    %204 = vector.shape_cast %203 : vector<1x4x16xf32> to vector<4x16xf32>
    %cst_213 = arith.constant dense<0.000000e+00> : vector<16x16xf32>
    %205 = tpu.matmul %202, %204, %cst_213 {dimension_numbers = #tpu.dot_dimension_numbers<[1], [0], [0], [1], [0, 0, 1, 1], [], []>} : vector<16x4xf32>, vector<4x16xf32>, vector<16x16xf32> -> vector<16x16xf32>
    %206 = arith.addf %200, %205 : vector<16x16xf32>
    %c1_214 = arith.constant 1 : index
    %c8_215 = arith.constant 8 : index
    %c0_216 = arith.constant 0 : index
    %207 = vector.load %arg13[%c1_214, %c8_215, %c0_216] : memref<2x32x32xf32, #tpu.memory_space<vmem>>, vector<1x16x4xf32>
    %208 = vector.shape_cast %207 : vector<1x16x4xf32> to vector<16x4xf32>
    %c3_217 = arith.constant 3 : index
    %c0_218 = arith.constant 0 : index
    %c0_219 = arith.constant 0 : index
    %209 = vector.load %arg1[%c3_217, %c0_218, %c0_219] : memref<8x4x16xf32, #tpu.memory_space<vmem>>, vector<1x4x16xf32>
    %210 = vector.shape_cast %209 : vector<1x4x16xf32> to vector<4x16xf32>
    %cst_220 = arith.constant dense<0.000000e+00> : vector<16x16xf32>
    %211 = tpu.matmul %208, %210, %cst_220 {dimension_numbers = #tpu.dot_dimension_numbers<[1], [0], [0], [1], [0, 0, 1, 1], [], []>} : vector<16x4xf32>, vector<4x16xf32>, vector<16x16xf32> -> vector<16x16xf32>
    %212 = arith.addf %206, %211 : vector<16x16xf32>
    %c1_221 = arith.constant 1 : index
    %c9_222 = arith.constant 9 : index
    %c0_223 = arith.constant 0 : index
    %213 = vector.load %arg13[%c1_221, %c9_222, %c0_223] : memref<2x32x32xf32, #tpu.memory_space<vmem>>, vector<1x16x4xf32>
    %214 = vector.shape_cast %213 : vector<1x16x4xf32> to vector<16x4xf32>
    %c4_224 = arith.constant 4 : index
    %c0_225 = arith.constant 0 : index
    %c0_226 = arith.constant 0 : index
    %215 = vector.load %arg1[%c4_224, %c0_225, %c0_226] : memref<8x4x16xf32, #tpu.memory_space<vmem>>, vector<1x4x16xf32>
    %216 = vector.shape_cast %215 : vector<1x4x16xf32> to vector<4x16xf32>
    %cst_227 = arith.constant dense<0.000000e+00> : vector<16x16xf32>
    %217 = tpu.matmul %214, %216, %cst_227 {dimension_numbers = #tpu.dot_dimension_numbers<[1], [0], [0], [1], [0, 0, 1, 1], [], []>} : vector<16x4xf32>, vector<4x16xf32>, vector<16x16xf32> -> vector<16x16xf32>
    %218 = arith.addf %212, %217 : vector<16x16xf32>
    %c1_228 = arith.constant 1 : index
    %c10_229 = arith.constant 10 : index
    %c0_230 = arith.constant 0 : index
    %219 = vector.load %arg13[%c1_228, %c10_229, %c0_230] : memref<2x32x32xf32, #tpu.memory_space<vmem>>, vector<1x16x4xf32>
    %220 = vector.shape_cast %219 : vector<1x16x4xf32> to vector<16x4xf32>
    %c5_231 = arith.constant 5 : index
    %c0_232 = arith.constant 0 : index
    %c0_233 = arith.constant 0 : index
    %221 = vector.load %arg1[%c5_231, %c0_232, %c0_233] : memref<8x4x16xf32, #tpu.memory_space<vmem>>, vector<1x4x16xf32>
    %222 = vector.shape_cast %221 : vector<1x4x16xf32> to vector<4x16xf32>
    %cst_234 = arith.constant dense<0.000000e+00> : vector<16x16xf32>
    %223 = tpu.matmul %220, %222, %cst_234 {dimension_numbers = #tpu.dot_dimension_numbers<[1], [0], [0], [1], [0, 0, 1, 1], [], []>} : vector<16x4xf32>, vector<4x16xf32>, vector<16x16xf32> -> vector<16x16xf32>
    %224 = arith.addf %218, %223 : vector<16x16xf32>
    %c1_235 = arith.constant 1 : index
    %c11_236 = arith.constant 11 : index
    %c0_237 = arith.constant 0 : index
    %225 = vector.load %arg13[%c1_235, %c11_236, %c0_237] : memref<2x32x32xf32, #tpu.memory_space<vmem>>, vector<1x16x4xf32>
    %226 = vector.shape_cast %225 : vector<1x16x4xf32> to vector<16x4xf32>
    %c6_238 = arith.constant 6 : index
    %c0_239 = arith.constant 0 : index
    %c0_240 = arith.constant 0 : index
    %227 = vector.load %arg1[%c6_238, %c0_239, %c0_240] : memref<8x4x16xf32, #tpu.memory_space<vmem>>, vector<1x4x16xf32>
    %228 = vector.shape_cast %227 : vector<1x4x16xf32> to vector<4x16xf32>
    %cst_241 = arith.constant dense<0.000000e+00> : vector<16x16xf32>
    %229 = tpu.matmul %226, %228, %cst_241 {dimension_numbers = #tpu.dot_dimension_numbers<[1], [0], [0], [1], [0, 0, 1, 1], [], []>} : vector<16x4xf32>, vector<4x16xf32>, vector<16x16xf32> -> vector<16x16xf32>
    %230 = arith.addf %224, %229 : vector<16x16xf32>
    %c1_242 = arith.constant 1 : index
    %c12_243 = arith.constant 12 : index
    %c0_244 = arith.constant 0 : index
    %231 = vector.load %arg13[%c1_242, %c12_243, %c0_244] : memref<2x32x32xf32, #tpu.memory_space<vmem>>, vector<1x16x4xf32>
    %232 = vector.shape_cast %231 : vector<1x16x4xf32> to vector<16x4xf32>
    %c7_245 = arith.constant 7 : index
    %c0_246 = arith.constant 0 : index
    %c0_247 = arith.constant 0 : index
    %233 = vector.load %arg1[%c7_245, %c0_246, %c0_247] : memref<8x4x16xf32, #tpu.memory_space<vmem>>, vector<1x4x16xf32>
    %234 = vector.shape_cast %233 : vector<1x4x16xf32> to vector<4x16xf32>
    %cst_248 = arith.constant dense<0.000000e+00> : vector<16x16xf32>
    %235 = tpu.matmul %232, %234, %cst_248 {dimension_numbers = #tpu.dot_dimension_numbers<[1], [0], [0], [1], [0, 0, 1, 1], [], []>} : vector<16x4xf32>, vector<4x16xf32>, vector<16x16xf32> -> vector<16x16xf32>
    %236 = arith.addf %230, %235 : vector<16x16xf32>
    %c0_249 = arith.constant 0 : index
    %c0_250 = arith.constant 0 : index
    %237 = vector.load %arg2[%c0_249, %c0_250] : memref<1x16xf32, #tpu.memory_space<vmem>>, vector<1x16xf32>
    %238 = vector.broadcast %237 : vector<1x16xf32> to vector<16x16xf32>
    %239 = arith.addf %236, %238 : vector<16x16xf32>
    %cst_251 = arith.constant 0.000000e+00 : f32
    %240 = vector.broadcast %cst_251 : f32 to vector<16x16xf32>
    %241 = arith.maximumf %239, %240 : vector<16x16xf32>
    %c1_252 = arith.constant 1 : index
    %c8_253 = arith.constant 8 : index
    %c0_254 = arith.constant 0 : index
    %242 = vector.load %arg13[%c1_252, %c8_253, %c0_254] : memref<2x32x32xf32, #tpu.memory_space<vmem>>, vector<1x16x16xf32>
    %243 = vector.shape_cast %242 : vector<1x16x16xf32> to vector<16x16xf32>
    %244 = vector.shape_cast %241 : vector<16x16xf32> to vector<1x16x16xf32>
    tpu.vector_store %arg13[%c1_252, %c8_253, %c0_254], %244 {strides = array<i32>} : memref<2x32x32xf32, #tpu.memory_space<vmem>>, vector<1x16x16xf32>,
    %cst_255 = arith.constant 0.000000e+00 : f32
    %245 = vector.broadcast %cst_255 : f32 to vector<16x32xf32>
    %c1_256 = arith.constant 1 : index
    %c6_257 = arith.constant 6 : index
    %c0_258 = arith.constant 0 : index
    %246 = vector.load %arg13[%c1_256, %c6_257, %c0_258] : memref<2x32x32xf32, #tpu.memory_space<vmem>>, vector<1x16x16xf32>
    %247 = vector.shape_cast %246 : vector<1x16x16xf32> to vector<16x16xf32>
    %c0_259 = arith.constant 0 : index
    %c0_260 = arith.constant 0 : index
    %c0_261 = arith.constant 0 : index
    %248 = vector.load %arg3[%c0_259, %c0_260, %c0_261] : memref<5x16x32xf32, #tpu.memory_space<vmem>>, vector<1x16x32xf32>
    %249 = vector.shape_cast %248 : vector<1x16x32xf32> to vector<16x32xf32>
    %cst_262 = arith.constant dense<0.000000e+00> : vector<16x32xf32>
    %250 = tpu.matmul %247, %249, %cst_262 {dimension_numbers = #tpu.dot_dimension_numbers<[1], [0], [0], [1], [0, 0, 1, 1], [], []>} : vector<16x16xf32>, vector<16x32xf32>, vector<16x32xf32> -> vector<16x32xf32>
    %251 = arith.addf %245, %250 : vector<16x32xf32>
    %c1_263 = arith.constant 1 : index
    %c7_264 = arith.constant 7 : index
    %c0_265 = arith.constant 0 : index
    %252 = vector.load %arg13[%c1_263, %c7_264, %c0_265] : memref<2x32x32xf32, #tpu.memory_space<vmem>>, vector<1x16x16xf32>
    %253 = vector.shape_cast %252 : vector<1x16x16xf32> to vector<16x16xf32>
    %c1_266 = arith.constant 1 : index
    %c0_267 = arith.constant 0 : index
    %c0_268 = arith.constant 0 : index
    %254 = vector.load %arg3[%c1_266, %c0_267, %c0_268] : memref<5x16x32xf32, #tpu.memory_space<vmem>>, vector<1x16x32xf32>
    %255 = vector.shape_cast %254 : vector<1x16x32xf32> to vector<16x32xf32>
    %cst_269 = arith.constant dense<0.000000e+00> : vector<16x32xf32>
    %256 = tpu.matmul %253, %255, %cst_269 {dimension_numbers = #tpu.dot_dimension_numbers<[1], [0], [0], [1], [0, 0, 1, 1], [], []>} : vector<16x16xf32>, vector<16x32xf32>, vector<16x32xf32> -> vector<16x32xf32>
    %257 = arith.addf %251, %256 : vector<16x32xf32>
    %c1_270 = arith.constant 1 : index
    %c8_271 = arith.constant 8 : index
    %c0_272 = arith.constant 0 : index
    %258 = vector.load %arg13[%c1_270, %c8_271, %c0_272] : memref<2x32x32xf32, #tpu.memory_space<vmem>>, vector<1x16x16xf32>
    %259 = vector.shape_cast %258 : vector<1x16x16xf32> to vector<16x16xf32>
    %c2_273 = arith.constant 2 : index
    %c0_274 = arith.constant 0 : index
    %c0_275 = arith.constant 0 : index
    %260 = vector.load %arg3[%c2_273, %c0_274, %c0_275] : memref<5x16x32xf32, #tpu.memory_space<vmem>>, vector<1x16x32xf32>
    %261 = vector.shape_cast %260 : vector<1x16x32xf32> to vector<16x32xf32>
    %cst_276 = arith.constant dense<0.000000e+00> : vector<16x32xf32>
    %262 = tpu.matmul %259, %261, %cst_276 {dimension_numbers = #tpu.dot_dimension_numbers<[1], [0], [0], [1], [0, 0, 1, 1], [], []>} : vector<16x16xf32>, vector<16x32xf32>, vector<16x32xf32> -> vector<16x32xf32>
    %263 = arith.addf %257, %262 : vector<16x32xf32>
    %c1_277 = arith.constant 1 : index
    %c9_278 = arith.constant 9 : index
    %c0_279 = arith.constant 0 : index
    %264 = vector.load %arg13[%c1_277, %c9_278, %c0_279] : memref<2x32x32xf32, #tpu.memory_space<vmem>>, vector<1x16x16xf32>
    %265 = vector.shape_cast %264 : vector<1x16x16xf32> to vector<16x16xf32>
    %c3_280 = arith.constant 3 : index
    %c0_281 = arith.constant 0 : index
    %c0_282 = arith.constant 0 : index
    %266 = vector.load %arg3[%c3_280, %c0_281, %c0_282] : memref<5x16x32xf32, #tpu.memory_space<vmem>>, vector<1x16x32xf32>
    %267 = vector.shape_cast %266 : vector<1x16x32xf32> to vector<16x32xf32>
    %cst_283 = arith.constant dense<0.000000e+00> : vector<16x32xf32>
    %268 = tpu.matmul %265, %267, %cst_283 {dimension_numbers = #tpu.dot_dimension_numbers<[1], [0], [0], [1], [0, 0, 1, 1], [], []>} : vector<16x16xf32>, vector<16x32xf32>, vector<16x32xf32> -> vector<16x32xf32>
    %269 = arith.addf %263, %268 : vector<16x32xf32>
    %c1_284 = arith.constant 1 : index
    %c10_285 = arith.constant 10 : index
    %c0_286 = arith.constant 0 : index
    %270 = vector.load %arg13[%c1_284, %c10_285, %c0_286] : memref<2x32x32xf32, #tpu.memory_space<vmem>>, vector<1x16x16xf32>
    %271 = vector.shape_cast %270 : vector<1x16x16xf32> to vector<16x16xf32>
    %c4_287 = arith.constant 4 : index
    %c0_288 = arith.constant 0 : index
    %c0_289 = arith.constant 0 : index
    %272 = vector.load %arg3[%c4_287, %c0_288, %c0_289] : memref<5x16x32xf32, #tpu.memory_space<vmem>>, vector<1x16x32xf32>
    %273 = vector.shape_cast %272 : vector<1x16x32xf32> to vector<16x32xf32>
    %cst_290 = arith.constant dense<0.000000e+00> : vector<16x32xf32>
    %274 = tpu.matmul %271, %273, %cst_290 {dimension_numbers = #tpu.dot_dimension_numbers<[1], [0], [0], [1], [0, 0, 1, 1], [], []>} : vector<16x16xf32>, vector<16x32xf32>, vector<16x32xf32> -> vector<16x32xf32>
    %275 = arith.addf %269, %274 : vector<16x32xf32>
    %c0_291 = arith.constant 0 : index
    %c0_292 = arith.constant 0 : index
    %276 = vector.load %arg4[%c0_291, %c0_292] : memref<1x32xf32, #tpu.memory_space<vmem>>, vector<1x32xf32>
    %277 = vector.broadcast %276 : vector<1x32xf32> to vector<16x32xf32>
    %278 = arith.addf %275, %277 : vector<16x32xf32>
    %cst_293 = arith.constant 0.000000e+00 : f32
    %279 = vector.broadcast %cst_293 : f32 to vector<16x32xf32>
    %280 = arith.maximumf %278, %279 : vector<16x32xf32>
    %c1_294 = arith.constant 1 : index
    %c8_295 = arith.constant 8 : index
    %c0_296 = arith.constant 0 : index
    %281 = vector.load %arg13[%c1_294, %c8_295, %c0_296] : memref<2x32x32xf32, #tpu.memory_space<vmem>>, vector<1x16x32xf32>
    %282 = vector.shape_cast %281 : vector<1x16x32xf32> to vector<16x32xf32>
    %283 = vector.shape_cast %280 : vector<16x32xf32> to vector<1x16x32xf32>
    tpu.vector_store %arg13[%c1_294, %c8_295, %c0_296], %283 {strides = array<i32>} : memref<2x32x32xf32, #tpu.memory_space<vmem>>, vector<1x16x32xf32>,
    %cst_297 = arith.constant 0.000000e+00 : f32
    %284 = vector.broadcast %cst_297 : f32 to vector<16x32xf32>
    %c1_298 = arith.constant 1 : index
    %c6_299 = arith.constant 6 : index
    %c0_300 = arith.constant 0 : index
    %285 = vector.load %arg13[%c1_298, %c6_299, %c0_300] : memref<2x32x32xf32, #tpu.memory_space<vmem>>, vector<1x16x32xf32>
    %286 = vector.shape_cast %285 : vector<1x16x32xf32> to vector<16x32xf32>
    %c0_301 = arith.constant 0 : index
    %c0_302 = arith.constant 0 : index
    %c0_303 = arith.constant 0 : index
    %287 = vector.load %arg5[%c0_301, %c0_302, %c0_303] : memref<5x32x32xf32, #tpu.memory_space<vmem>>, vector<1x32x32xf32>
    %288 = vector.shape_cast %287 : vector<1x32x32xf32> to vector<32x32xf32>
    %cst_304 = arith.constant dense<0.000000e+00> : vector<16x32xf32>
    %289 = tpu.matmul %286, %288, %cst_304 {dimension_numbers = #tpu.dot_dimension_numbers<[1], [0], [0], [1], [0, 0, 1, 1], [], []>} : vector<16x32xf32>, vector<32x32xf32>, vector<16x32xf32> -> vector<16x32xf32>
    %290 = arith.addf %284, %289 : vector<16x32xf32>
    %c1_305 = arith.constant 1 : index
    %c7_306 = arith.constant 7 : index
    %c0_307 = arith.constant 0 : index
    %291 = vector.load %arg13[%c1_305, %c7_306, %c0_307] : memref<2x32x32xf32, #tpu.memory_space<vmem>>, vector<1x16x32xf32>
    %292 = vector.shape_cast %291 : vector<1x16x32xf32> to vector<16x32xf32>
    %c1_308 = arith.constant 1 : index
    %c0_309 = arith.constant 0 : index
    %c0_310 = arith.constant 0 : index
    %293 = vector.load %arg5[%c1_308, %c0_309, %c0_310] : memref<5x32x32xf32, #tpu.memory_space<vmem>>, vector<1x32x32xf32>
    %294 = vector.shape_cast %293 : vector<1x32x32xf32> to vector<32x32xf32>
    %cst_311 = arith.constant dense<0.000000e+00> : vector<16x32xf32>
    %295 = tpu.matmul %292, %294, %cst_311 {dimension_numbers = #tpu.dot_dimension_numbers<[1], [0], [0], [1], [0, 0, 1, 1], [], []>} : vector<16x32xf32>, vector<32x32xf32>, vector<16x32xf32> -> vector<16x32xf32>
    %296 = arith.addf %290, %295 : vector<16x32xf32>
    %c1_312 = arith.constant 1 : index
    %c8_313 = arith.constant 8 : index
    %c0_314 = arith.constant 0 : index
    %297 = vector.load %arg13[%c1_312, %c8_313, %c0_314] : memref<2x32x32xf32, #tpu.memory_space<vmem>>, vector<1x16x32xf32>
    %298 = vector.shape_cast %297 : vector<1x16x32xf32> to vector<16x32xf32>
    %c2_315 = arith.constant 2 : index
    %c0_316 = arith.constant 0 : index
    %c0_317 = arith.constant 0 : index
    %299 = vector.load %arg5[%c2_315, %c0_316, %c0_317] : memref<5x32x32xf32, #tpu.memory_space<vmem>>, vector<1x32x32xf32>
    %300 = vector.shape_cast %299 : vector<1x32x32xf32> to vector<32x32xf32>
    %cst_318 = arith.constant dense<0.000000e+00> : vector<16x32xf32>
    %301 = tpu.matmul %298, %300, %cst_318 {dimension_numbers = #tpu.dot_dimension_numbers<[1], [0], [0], [1], [0, 0, 1, 1], [], []>} : vector<16x32xf32>, vector<32x32xf32>, vector<16x32xf32> -> vector<16x32xf32>
    %302 = arith.addf %296, %301 : vector<16x32xf32>
    %c1_319 = arith.constant 1 : index
    %c9_320 = arith.constant 9 : index
    %c0_321 = arith.constant 0 : index
    %303 = vector.load %arg13[%c1_319, %c9_320, %c0_321] : memref<2x32x32xf32, #tpu.memory_space<vmem>>, vector<1x16x32xf32>
    %304 = vector.shape_cast %303 : vector<1x16x32xf32> to vector<16x32xf32>
    %c3_322 = arith.constant 3 : index
    %c0_323 = arith.constant 0 : index
    %c0_324 = arith.constant 0 : index
    %305 = vector.load %arg5[%c3_322, %c0_323, %c0_324] : memref<5x32x32xf32, #tpu.memory_space<vmem>>, vector<1x32x32xf32>
    %306 = vector.shape_cast %305 : vector<1x32x32xf32> to vector<32x32xf32>
    %cst_325 = arith.constant dense<0.000000e+00> : vector<16x32xf32>
    %307 = tpu.matmul %304, %306, %cst_325 {dimension_numbers = #tpu.dot_dimension_numbers<[1], [0], [0], [1], [0, 0, 1, 1], [], []>} : vector<16x32xf32>, vector<32x32xf32>, vector<16x32xf32> -> vector<16x32xf32>
    %308 = arith.addf %302, %307 : vector<16x32xf32>
    %c1_326 = arith.constant 1 : index
    %c10_327 = arith.constant 10 : index
    %c0_328 = arith.constant 0 : index
    %309 = vector.load %arg13[%c1_326, %c10_327, %c0_328] : memref<2x32x32xf32, #tpu.memory_space<vmem>>, vector<1x16x32xf32>
    %310 = vector.shape_cast %309 : vector<1x16x32xf32> to vector<16x32xf32>
    %c4_329 = arith.constant 4 : index
    %c0_330 = arith.constant 0 : index
    %c0_331 = arith.constant 0 : index
    %311 = vector.load %arg5[%c4_329, %c0_330, %c0_331] : memref<5x32x32xf32, #tpu.memory_space<vmem>>, vector<1x32x32xf32>
    %312 = vector.shape_cast %311 : vector<1x32x32xf32> to vector<32x32xf32>
    %cst_332 = arith.constant dense<0.000000e+00> : vector<16x32xf32>
    %313 = tpu.matmul %310, %312, %cst_332 {dimension_numbers = #tpu.dot_dimension_numbers<[1], [0], [0], [1], [0, 0, 1, 1], [], []>} : vector<16x32xf32>, vector<32x32xf32>, vector<16x32xf32> -> vector<16x32xf32>
    %314 = arith.addf %308, %313 : vector<16x32xf32>
    %c0_333 = arith.constant 0 : index
    %c0_334 = arith.constant 0 : index
    %315 = vector.load %arg6[%c0_333, %c0_334] : memref<1x32xf32, #tpu.memory_space<vmem>>, vector<1x32xf32>
    %316 = vector.broadcast %315 : vector<1x32xf32> to vector<16x32xf32>
    %317 = arith.addf %314, %316 : vector<16x32xf32>
    %cst_335 = arith.constant 0.000000e+00 : f32
    %318 = vector.broadcast %cst_335 : f32 to vector<16x32xf32>
    %319 = arith.maximumf %317, %318 : vector<16x32xf32>
    %c1_336 = arith.constant 1 : index
    %c8_337 = arith.constant 8 : index
    %c0_338 = arith.constant 0 : index
    %320 = vector.load %arg13[%c1_336, %c8_337, %c0_338] : memref<2x32x32xf32, #tpu.memory_space<vmem>>, vector<1x16x32xf32>
    %321 = vector.shape_cast %320 : vector<1x16x32xf32> to vector<16x32xf32>
    %322 = vector.shape_cast %319 : vector<16x32xf32> to vector<1x16x32xf32>
    tpu.vector_store %arg13[%c1_336, %c8_337, %c0_338], %322 {strides = array<i32>} : memref<2x32x32xf32, #tpu.memory_space<vmem>>, vector<1x16x32xf32>,
    %cst_339 = arith.constant 0.000000e+00 : f32
    %323 = vector.broadcast %cst_339 : f32 to vector<16x16xf32>
    %c1_340 = arith.constant 1 : index
    %c6_341 = arith.constant 6 : index
    %c0_342 = arith.constant 0 : index
    %324 = vector.load %arg13[%c1_340, %c6_341, %c0_342] : memref<2x32x32xf32, #tpu.memory_space<vmem>>, vector<1x16x32xf32>
    %325 = vector.shape_cast %324 : vector<1x16x32xf32> to vector<16x32xf32>
    %c0_343 = arith.constant 0 : index
    %c0_344 = arith.constant 0 : index
    %c0_345 = arith.constant 0 : index
    %326 = vector.load %arg7[%c0_343, %c0_344, %c0_345] : memref<5x32x16xf32, #tpu.memory_space<vmem>>, vector<1x32x16xf32>
    %327 = vector.shape_cast %326 : vector<1x32x16xf32> to vector<32x16xf32>
    %cst_346 = arith.constant dense<0.000000e+00> : vector<16x16xf32>
    %328 = tpu.matmul %325, %327, %cst_346 {dimension_numbers = #tpu.dot_dimension_numbers<[1], [0], [0], [1], [0, 0, 1, 1], [], []>} : vector<16x32xf32>, vector<32x16xf32>, vector<16x16xf32> -> vector<16x16xf32>
    %329 = arith.addf %323, %328 : vector<16x16xf32>
    %c1_347 = arith.constant 1 : index
    %c7_348 = arith.constant 7 : index
    %c0_349 = arith.constant 0 : index
    %330 = vector.load %arg13[%c1_347, %c7_348, %c0_349] : memref<2x32x32xf32, #tpu.memory_space<vmem>>, vector<1x16x32xf32>
    %331 = vector.shape_cast %330 : vector<1x16x32xf32> to vector<16x32xf32>
    %c1_350 = arith.constant 1 : index
    %c0_351 = arith.constant 0 : index
    %c0_352 = arith.constant 0 : index
    %332 = vector.load %arg7[%c1_350, %c0_351, %c0_352] : memref<5x32x16xf32, #tpu.memory_space<vmem>>, vector<1x32x16xf32>
    %333 = vector.shape_cast %332 : vector<1x32x16xf32> to vector<32x16xf32>
    %cst_353 = arith.constant dense<0.000000e+00> : vector<16x16xf32>
    %334 = tpu.matmul %331, %333, %cst_353 {dimension_numbers = #tpu.dot_dimension_numbers<[1], [0], [0], [1], [0, 0, 1, 1], [], []>} : vector<16x32xf32>, vector<32x16xf32>, vector<16x16xf32> -> vector<16x16xf32>
    %335 = arith.addf %329, %334 : vector<16x16xf32>
    %c1_354 = arith.constant 1 : index
    %c8_355 = arith.constant 8 : index
    %c0_356 = arith.constant 0 : index
    %336 = vector.load %arg13[%c1_354, %c8_355, %c0_356] : memref<2x32x32xf32, #tpu.memory_space<vmem>>, vector<1x16x32xf32>
    %337 = vector.shape_cast %336 : vector<1x16x32xf32> to vector<16x32xf32>
    %c2_357 = arith.constant 2 : index
    %c0_358 = arith.constant 0 : index
    %c0_359 = arith.constant 0 : index
    %338 = vector.load %arg7[%c2_357, %c0_358, %c0_359] : memref<5x32x16xf32, #tpu.memory_space<vmem>>, vector<1x32x16xf32>
    %339 = vector.shape_cast %338 : vector<1x32x16xf32> to vector<32x16xf32>
    %cst_360 = arith.constant dense<0.000000e+00> : vector<16x16xf32>
    %340 = tpu.matmul %337, %339, %cst_360 {dimension_numbers = #tpu.dot_dimension_numbers<[1], [0], [0], [1], [0, 0, 1, 1], [], []>} : vector<16x32xf32>, vector<32x16xf32>, vector<16x16xf32> -> vector<16x16xf32>
    %341 = arith.addf %335, %340 : vector<16x16xf32>
    %c1_361 = arith.constant 1 : index
    %c9_362 = arith.constant 9 : index
    %c0_363 = arith.constant 0 : index
    %342 = vector.load %arg13[%c1_361, %c9_362, %c0_363] : memref<2x32x32xf32, #tpu.memory_space<vmem>>, vector<1x16x32xf32>
    %343 = vector.shape_cast %342 : vector<1x16x32xf32> to vector<16x32xf32>
    %c3_364 = arith.constant 3 : index
    %c0_365 = arith.constant 0 : index
    %c0_366 = arith.constant 0 : index
    %344 = vector.load %arg7[%c3_364, %c0_365, %c0_366] : memref<5x32x16xf32, #tpu.memory_space<vmem>>, vector<1x32x16xf32>
    %345 = vector.shape_cast %344 : vector<1x32x16xf32> to vector<32x16xf32>
    %cst_367 = arith.constant dense<0.000000e+00> : vector<16x16xf32>
    %346 = tpu.matmul %343, %345, %cst_367 {dimension_numbers = #tpu.dot_dimension_numbers<[1], [0], [0], [1], [0, 0, 1, 1], [], []>} : vector<16x32xf32>, vector<32x16xf32>, vector<16x16xf32> -> vector<16x16xf32>
    %347 = arith.addf %341, %346 : vector<16x16xf32>
    %c1_368 = arith.constant 1 : index
    %c10_369 = arith.constant 10 : index
    %c0_370 = arith.constant 0 : index
    %348 = vector.load %arg13[%c1_368, %c10_369, %c0_370] : memref<2x32x32xf32, #tpu.memory_space<vmem>>, vector<1x16x32xf32>
    %349 = vector.shape_cast %348 : vector<1x16x32xf32> to vector<16x32xf32>
    %c4_371 = arith.constant 4 : index
    %c0_372 = arith.constant 0 : index
    %c0_373 = arith.constant 0 : index
    %350 = vector.load %arg7[%c4_371, %c0_372, %c0_373] : memref<5x32x16xf32, #tpu.memory_space<vmem>>, vector<1x32x16xf32>
    %351 = vector.shape_cast %350 : vector<1x32x16xf32> to vector<32x16xf32>
    %cst_374 = arith.constant dense<0.000000e+00> : vector<16x16xf32>
    %352 = tpu.matmul %349, %351, %cst_374 {dimension_numbers = #tpu.dot_dimension_numbers<[1], [0], [0], [1], [0, 0, 1, 1], [], []>} : vector<16x32xf32>, vector<32x16xf32>, vector<16x16xf32> -> vector<16x16xf32>
    %353 = arith.addf %347, %352 : vector<16x16xf32>
    %c0_375 = arith.constant 0 : index
    %c0_376 = arith.constant 0 : index
    %354 = vector.load %arg8[%c0_375, %c0_376] : memref<1x16xf32, #tpu.memory_space<vmem>>, vector<1x16xf32>
    %355 = vector.broadcast %354 : vector<1x16xf32> to vector<16x16xf32>
    %356 = arith.addf %353, %355 : vector<16x16xf32>
    %cst_377 = arith.constant 0.000000e+00 : f32
    %357 = vector.broadcast %cst_377 : f32 to vector<16x16xf32>
    %358 = arith.maximumf %356, %357 : vector<16x16xf32>
    %cst_378 = arith.constant dense<0.000000e+00> : vector<16xf32>
    %359 = vector.multi_reduction <add>, %358, %cst_378 [0] : vector<16x16xf32> to vector<16xf32>
    %360 = vector.shape_cast %359 : vector<16xf32> to vector<1x16xf32>
    %cst_379 = arith.constant 1.600000e+01 : f32
    %361 = vector.broadcast %cst_379 : f32 to vector<1x16xf32>
    %362 = arith.divf %360, %361 : vector<1x16xf32>
    %c1_380 = arith.constant 1 : index
    %c0_381 = arith.constant 0 : index
    %363 = vector.load %arg11[%c1_380, %c0_381] : memref<2x16xf32, #tpu.memory_space<vmem>>, vector<1x16xf32>
    tpu.vector_store %arg11[%c1_380, %c0_381], %362 {strides = array<i32>} : memref<2x16xf32, #tpu.memory_space<vmem>>, vector<1x16xf32>,
    %c0_382 = arith.constant 0 : index
    %c0_383 = arith.constant 0 : index
    %364 = vector.load %arg11[%c0_382, %c0_383] : memref<2x16xf32, #tpu.memory_space<vmem>>, vector<2x16xf32>
    %c0_384 = arith.constant 0 : index
    %c0_385 = arith.constant 0 : index
    %365 = vector.load %arg9[%c0_384, %c0_385] : memref<16x3xf32, #tpu.memory_space<vmem>>, vector<16x3xf32>
    %cst_386 = arith.constant dense<0.000000e+00> : vector<2x3xf32>
    %366 = tpu.matmul %364, %365, %cst_386 {dimension_numbers = #tpu.dot_dimension_numbers<[1], [0], [0], [1], [0, 0, 1, 1], [], []>} : vector<2x16xf32>, vector<16x3xf32>, vector<2x3xf32> -> vector<2x3xf32>
    %c0_387 = arith.constant 0 : index
    %c0_388 = arith.constant 0 : index
    %367 = vector.load %arg10[%c0_387, %c0_388] : memref<1x3xf32, #tpu.memory_space<vmem>>, vector<1x3xf32>
    %368 = vector.broadcast %367 : vector<1x3xf32> to vector<2x3xf32>
    %369 = arith.addf %366, %368 : vector<2x3xf32>
    %c0_389 = arith.constant 0 : index
    %c0_390 = arith.constant 0 : index
    %370 = vector.load %arg12[%c0_389, %c0_390] : memref<2x3xf32, #tpu.memory_space<vmem>>, vector<2x3xf32>
    tpu.vector_store %arg12[%c0_389, %c0_390], %369 {strides = array<i32>} : memref<2x3xf32, #tpu.memory_space<vmem>>, vector<2x3xf32>,
    return
  }
}

</mosaic_0001>

<llo_original>
// kernel: small_fcn_forward.1
$region0: #{small_fcn_forward.1}
  #allocation0 [shape = 'u32[]', space=smem, size = 0x4, offset = 0x4, fixed_abs, tag = 'smem constant byte address 0x4 - core index']
  #allocation1 [shape = 'u32[72,128]{1,0:T(1,128)}', space=vmem, size = 0x9000, scoped, tag = 'internal scratch']
  #allocation2 [shape = 'f32[2,32,32]{2,1,0:T(8,128)}', space=vmem, size = 0x8000, scoped, tag = 'scratch operand']
  %s0 = inlined_call_operand.vmem [shape: f32[2,16,4], index: 0, kind: input, shape index: {}]
  %s1 = inlined_call_operand.vmem [shape: f32[8,4,16], index: 1, kind: input, shape index: {}]
  %s2 = inlined_call_operand.vmem [shape: f32[1,16], index: 2, kind: input, shape index: {}]
  %s3 = inlined_call_operand.vmem [shape: f32[5,16,32], index: 3, kind: input, shape index: {}]
  %s4 = inlined_call_operand.vmem [shape: f32[1,32], index: 4, kind: input, shape index: {}]
  %s5 = inlined_call_operand.vmem [shape: f32[5,32,32], index: 5, kind: input, shape index: {}]
  %s6 = inlined_call_operand.vmem [shape: f32[1,32], index: 6, kind: input, shape index: {}]
  %s7 = inlined_call_operand.vmem [shape: f32[5,32,16], index: 7, kind: input, shape index: {}]
  %s8 = inlined_call_operand.vmem [shape: f32[1,16], index: 8, kind: input, shape index: {}]
  %s9 = inlined_call_operand.vmem [shape: f32[16,3], index: 9, kind: input, shape index: {}]
  %s10 = inlined_call_operand.vmem [shape: f32[1,3], index: 10, kind: input, shape index: {}]
  %s11 = inlined_call_operand.hbm [shape: f32[2,16], index: 11, kind: output, shape index: {0}]
  %s12 = inlined_call_operand.hbm [shape: f32[2,3], index: 12, kind: output, shape index: {1}]
  %13 = xla_tuple %s11, %s12
  %s14 = sld [smem:[#allocation0]]
  $region62: #{small_fcn_forward.1} parent=0
    _
  %s16 = ssub.s32 1, %s14
  %s17 = scalar_select 0, %s16, %s14
  $region1: #{small_fcn_forward.1} parent=0
    #allocation3 [shape = 'u8[1024]{0}', space=vmem, size = 0x400, scoped, tag = 'output window, operand 0, single buffered']
    #allocation4 [shape = 's32[1]{0}', space=sflag, size = 0x4, scoped, tag = 'scoped memory for small_fcn_forward.1']
    #allocation5 [shape = 'u8[1024]{0}', space=vmem, size = 0x400, scoped, tag = 'output window, operand 1, single buffered']
    #allocation6 [shape = 's32[1]{0}', space=sflag, size = 0x4, scoped, tag = 'scoped memory for small_fcn_forward.1']
    %18 = vsyncpa [#allocation4], 0
    %19 = vsyncpa [#allocation6], 0
    // Predicated region
    $region2: #{small_fcn_forward.1} parent=1 // pred_check
      _
    $region3: #{small_fcn_forward.1} parent=1 // pred_check_branch
      %21 = sbr.rel (0) target = $region5
    $region4: #{small_fcn_forward.1} parent=1 // pred_region
      _
    $region5: #{small_fcn_forward.1} parent=1 // pred_fallthru
      _
    // Predicated region
    $region6: #{small_fcn_forward.1} parent=1 // pred_check
      _
    $region7: #{small_fcn_forward.1} parent=1 // pred_check_branch
      %23 = sbr.rel (0) target = $region9
    $region8: #{small_fcn_forward.1} parent=1 // pred_region
      _
    $region9: #{small_fcn_forward.1} parent=1 // pred_fallthru
      _
    // Predicated region
    $region10: #{small_fcn_forward.1} parent=1 // pred_check
      _
    $region11: #{small_fcn_forward.1} parent=1 // pred_check_branch
      %25 = sbr.rel (0) target = $region13
    $region12: #{small_fcn_forward.1} parent=1 // pred_region
      _
    $region13: #{small_fcn_forward.1} parent=1 // pred_fallthru
      _
    // Predicated region
    $region14: #{small_fcn_forward.1} parent=1 // pred_check
      _
    $region15: #{small_fcn_forward.1} parent=1 // pred_check_branch
      %27 = sbr.rel (0) target = $region17
    $region16: #{small_fcn_forward.1} parent=1 // pred_region
      _
    $region17: #{small_fcn_forward.1} parent=1 // pred_fallthru
      _
    // Predicated region
    $region18: #{small_fcn_forward.1} parent=1 // pred_check
      _
    $region19: #{small_fcn_forward.1} parent=1 // pred_check_branch
      %29 = sbr.rel (0) target = $region21
    $region20: #{small_fcn_forward.1} parent=1 // pred_region
      _
    $region21: #{small_fcn_forward.1} parent=1 // pred_fallthru
      _
    // Predicated region
    $region22: #{small_fcn_forward.1} parent=1 // pred_check
      _
    $region23: #{small_fcn_forward.1} parent=1 // pred_check_branch
      %31 = sbr.rel (0) target = $region25
    $region24: #{small_fcn_forward.1} parent=1 // pred_region
      _
    $region25: #{small_fcn_forward.1} parent=1 // pred_fallthru
      _
    // Predicated region
    $region26: #{small_fcn_forward.1} parent=1 // pred_check
      _
    $region27: #{small_fcn_forward.1} parent=1 // pred_check_branch
      %33 = sbr.rel (0) target = $region29
    $region28: #{small_fcn_forward.1} parent=1 // pred_region
      _
    $region29: #{small_fcn_forward.1} parent=1 // pred_fallthru
      _
    // Predicated region
    $region30: #{small_fcn_forward.1} parent=1 // pred_check
      _
    $region31: #{small_fcn_forward.1} parent=1 // pred_check_branch
      %35 = sbr.rel (0) target = $region33
    $region32: #{small_fcn_forward.1} parent=1 // pred_region
      _
    $region33: #{small_fcn_forward.1} parent=1 // pred_fallthru
      _
    // Predicated region
    $region34: #{small_fcn_forward.1} parent=1 // pred_check
      _
    $region35: #{small_fcn_forward.1} parent=1 // pred_check_branch
      %37 = sbr.rel (0) target = $region37
    $region36: #{small_fcn_forward.1} parent=1 // pred_region
      _
    $region37: #{small_fcn_forward.1} parent=1 // pred_fallthru
      _
    // Predicated region
    $region38: #{small_fcn_forward.1} parent=1 // pred_check
      _
    $region39: #{small_fcn_forward.1} parent=1 // pred_check_branch
      %39 = sbr.rel (0) target = $region41
    $region40: #{small_fcn_forward.1} parent=1 // pred_region
      _
    $region41: #{small_fcn_forward.1} parent=1 // pred_fallthru
      _
    // Predicated region
    $region42: #{small_fcn_forward.1} parent=1 // pred_check
      _
    $region43: #{small_fcn_forward.1} parent=1 // pred_check_branch
      %41 = sbr.rel (0) target = $region45
    $region44: #{small_fcn_forward.1} parent=1 // pred_region
      _
    $region45: #{small_fcn_forward.1} parent=1 // pred_fallthru
      _
    %vm42 = vcmask 261120
    %43 = vst.msk [vmem:[#allocation2] sm:$0xff] %vm42, 0.0
    %44 = vst.msk [vmem:[#allocation2 + $0x8] sm:$0xff] %vm42, 0.0
    %45 = vst.msk [vmem:[#allocation2 + $0x10] sm:$0xff] %vm42, 0.0
    %46 = vst.msk [vmem:[#allocation2 + $0x18] sm:$0xff] %vm42, 0.0
    %47 = vst.msk [vmem:[#allocation2 + $0x20] sm:$0xff] %vm42, 0.0
    %48 = vst.msk [vmem:[#allocation2 + $0x28] sm:$0xff] %vm42, 0.0
    %49 = vst.msk [vmem:[#allocation2 + $0x30] sm:$0xff] %vm42, 0.0
    %50 = vst.msk [vmem:[#allocation2 + $0x38] sm:$0xff] %vm42, 0.0
    %v51 = vld [vmem:[%s0] sm:$0xff]
    %v52 = vld [vmem:[%s0 + $0x8] sm:$0xff]
    %vm53 = vcmask 31744
    %54 = vst.msk [vmem:[#allocation2 + $0x8] sm:$0xff] %vm53, %v51
    %55 = vst.msk [vmem:[#allocation2 + $0x10] sm:$0xff] %vm53, %v52
    %v56 = vld [vmem:[#allocation2 + $0x5] sm:$0xff]
    %v57 = vld [vmem:[#allocation2 + $0xd] sm:$0xff]
    %v58 = vld [vmem:[%s1] sm:$0xf]
    %v59 = vld [vmem:[#allocation2 + $0x6] sm:$0xff]
    %v60 = vld [vmem:[#allocation2 + $0xe] sm:$0xff]
    %s61 = scalar_lea.vmem %s1, 4
    %v62 = vld [vmem:[%s61] sm:$0xf]
    %v64 = vsel %vm53, %v59, 0
    %v67 = vsel %vm53, %v60, 0
    %vm69 = vcmask 1043456
    %v71 = vsel %vm69, %v62, 0
    %73 = vmatpush.msra.mxu0 0.0
    %74 = vmatpush.msra.mxu0 0.0
    %75 = vmatpush.msra.mxu0 0.0
    %76 = vmatpush.msra.mxu0 0.0
    %77 = vmatpush.msra.mxu0 0.0
    %78 = vmatpush.msra.mxu0 0.0
    %79 = vmatpush.msra.mxu0 0.0
    %80 = vmatpush.msra.mxu0 0.0
    %81 = vmatpush.msra.mxu0 0.0
    %82 = vmatpush.msra.mxu0 0.0
    %83 = vmatpush.msra.mxu0 0.0
    %84 = vmatpush.msra.mxu0 0.0
    %85 = vmatpush.msra.mxu0 0.0
    %86 = vmatpush.msra.mxu0 0.0
    %87 = vmatpush.msra.mxu0 0.0
    %88 = vmatpush.msra.mxu0 %v71
    %89 = vmatmul.f32.gmra.mxu0 %v64
    %v90 = vpop.f32.mrf.mxu0
    %v91 = vadd.f32 0.0, %v90
    %92 = vmatmul.f32.gmra.mxu0 %v67
    %v93 = vpop.f32.mrf.mxu0
    %v94 = vadd.f32 0.0, %v93
    %95 = vdwg.mxu0
    %v97 = vsel %vm53, %v56, 0
    %v100 = vsel %vm53, %v57, 0
    %v103 = vsel %vm69, %v58, 0
    %105 = vmatpush.msra.mxu0 0.0
    %106 = vmatpush.msra.mxu0 0.0
    %107 = vmatpush.msra.mxu0 0.0
    %108 = vmatpush.msra.mxu0 0.0
    %109 = vmatpush.msra.mxu0 0.0
    %110 = vmatpush.msra.mxu0 0.0
    %111 = vmatpush.msra.mxu0 0.0
    %112 = vmatpush.msra.mxu0 0.0
    %113 = vmatpush.msra.mxu0 0.0
    %114 = vmatpush.msra.mxu0 0.0
    %115 = vmatpush.msra.mxu0 0.0
    %116 = vmatpush.msra.mxu0 0.0
    %117 = vmatpush.msra.mxu0 0.0
    %118 = vmatpush.msra.mxu0 0.0
    %119 = vmatpush.msra.mxu0 0.0
    %120 = vmatpush.msra.mxu0 %v103
    %121 = vmatmul.f32.gmra.mxu0 %v97
    %v122 = vpop.f32.mrf.mxu0
    %v123 = vadd.f32 %v91, %v122
    %124 = vmatmul.f32.gmra.mxu0 %v100
    %v125 = vpop.f32.mrf.mxu0
    %v126 = vadd.f32 %v94, %v125
    %127 = vdwg.mxu0
    %v128 = vld [vmem:[#allocation2 + $0x7] sm:$0xff]
    %v129 = vld [vmem:[#allocation2 + $0xf] sm:$0xff]
    %s130 = scalar_lea.vmem %s1, 8
    %v131 = vld [vmem:[%s130] sm:$0xf]
    %v133 = vsel %vm53, %v128, 0
    %v136 = vsel %vm53, %v129, 0
    %v139 = vsel %vm69, %v131, 0
    %141 = vmatpush.msra.mxu0 0.0
    %142 = vmatpush.msra.mxu0 0.0
    %143 = vmatpush.msra.mxu0 0.0
    %144 = vmatpush.msra.mxu0 0.0
    %145 = vmatpush.msra.mxu0 0.0
    %146 = vmatpush.msra.mxu0 0.0
    %147 = vmatpush.msra.mxu0 0.0
    %148 = vmatpush.msra.mxu0 0.0
    %149 = vmatpush.msra.mxu0 0.0
    %150 = vmatpush.msra.mxu0 0.0
    %151 = vmatpush.msra.mxu0 0.0
    %152 = vmatpush.msra.mxu0 0.0
    %153 = vmatpush.msra.mxu0 0.0
    %154 = vmatpush.msra.mxu0 0.0
    %155 = vmatpush.msra.mxu0 0.0
    %156 = vmatpush.msra.mxu0 %v139
    %157 = vmatmul.f32.gmra.mxu0 %v133
    %v158 = vpop.f32.mrf.mxu0
    %v159 = vadd.f32 0.0, %v158
    %160 = vmatmul.f32.gmra.mxu0 %v136
    %v161 = vpop.f32.mrf.mxu0
    %v162 = vadd.f32 0.0, %v161
    %163 = vdwg.mxu0
    %v164 = vadd.f32 %v123, %v159
    %v165 = vadd.f32 %v126, %v162
    %v166 = vld [vmem:[#allocation2 + $0x8] sm:$0xff]
    %v167 = vld [vmem:[#allocation2 + $0x10] sm:$0xff]
    %s168 = scalar_lea.vmem %s1, 12
    %v169 = vld [vmem:[%s168] sm:$0xf]
    %v171 = vsel %vm53, %v166, 0
    %v174 = vsel %vm53, %v167, 0
    %v177 = vsel %vm69, %v169, 0
    %179 = vmatpush.msra.mxu0 0.0
    %180 = vmatpush.msra.mxu0 0.0
    %181 = vmatpush.msra.mxu0 0.0
    %182 = vmatpush.msra.mxu0 0.0
    %183 = vmatpush.msra.mxu0 0.0
    %184 = vmatpush.msra.mxu0 0.0
    %185 = vmatpush.msra.mxu0 0.0
    %186 = vmatpush.msra.mxu0 0.0
    %187 = vmatpush.msra.mxu0 0.0
    %188 = vmatpush.msra.mxu0 0.0
    %189 = vmatpush.msra.mxu0 0.0
    %190 = vmatpush.msra.mxu0 0.0
    %191 = vmatpush.msra.mxu0 0.0
    %192 = vmatpush.msra.mxu0 0.0
    %193 = vmatpush.msra.mxu0 0.0
    %194 = vmatpush.msra.mxu0 %v177
    %195 = vmatmul.f32.gmra.mxu0 %v171
    %v196 = vpop.f32.mrf.mxu0
    %v197 = vadd.f32 0.0, %v196
    %198 = vmatmul.f32.gmra.mxu0 %v174
    %v199 = vpop.f32.mrf.mxu0
    %v200 = vadd.f32 0.0, %v199
    %201 = vdwg.mxu0
    %v202 = vadd.f32 %v164, %v197
    %v203 = vadd.f32 %v165, %v200
    %v204 = vld [vmem:[#allocation2 + $0x9] sm:$0xff]
    %v205 = vld [vmem:[#allocation2 + $0x11] sm:$0xff]
    %s206 = scalar_lea.vmem %s1, 16
    %v207 = vld [vmem:[%s206] sm:$0xf]
    %v209 = vsel %vm53, %v204, 0
    %v212 = vsel %vm53, %v205, 0
    %v215 = vsel %vm69, %v207, 0
    %217 = vmatpush.msra.mxu0 0.0
    %218 = vmatpush.msra.mxu0 0.0
    %219 = vmatpush.msra.mxu0 0.0
    %220 = vmatpush.msra.mxu0 0.0
    %221 = vmatpush.msra.mxu0 0.0
    %222 = vmatpush.msra.mxu0 0.0
    %223 = vmatpush.msra.mxu0 0.0
    %224 = vmatpush.msra.mxu0 0.0
    %225 = vmatpush.msra.mxu0 0.0
    %226 = vmatpush.msra.mxu0 0.0
    %227 = vmatpush.msra.mxu0 0.0
    %228 = vmatpush.msra.mxu0 0.0
    %229 = vmatpush.msra.mxu0 0.0
    %230 = vmatpush.msra.mxu0 0.0
    %231 = vmatpush.msra.mxu0 0.0
    %232 = vmatpush.msra.mxu0 %v215
    %233 = vmatmul.f32.gmra.mxu0 %v209
    %v234 = vpop.f32.mrf.mxu0
    %v235 = vadd.f32 0.0, %v234
    %236 = vmatmul.f32.gmra.mxu0 %v212
    %v237 = vpop.f32.mrf.mxu0
    %v238 = vadd.f32 0.0, %v237
    %239 = vdwg.mxu0
    %v240 = vadd.f32 %v202, %v235
    %v241 = vadd.f32 %v203, %v238
    %v242 = vld [vmem:[#allocation2 + $0xa] sm:$0xff]
    %v243 = vld [vmem:[#allocation2 + $0x12] sm:$0xff]
    %s244 = scalar_lea.vmem %s1, 20
    %v245 = vld [vmem:[%s244] sm:$0xf]
    %v247 = vsel %vm53, %v242, 0
    %v250 = vsel %vm53, %v243, 0
    %v253 = vsel %vm69, %v245, 0
    %255 = vmatpush.msra.mxu0 0.0
    %256 = vmatpush.msra.mxu0 0.0
    %257 = vmatpush.msra.mxu0 0.0
    %258 = vmatpush.msra.mxu0 0.0
    %259 = vmatpush.msra.mxu0 0.0
    %260 = vmatpush.msra.mxu0 0.0
    %261 = vmatpush.msra.mxu0 0.0
    %262 = vmatpush.msra.mxu0 0.0
    %263 = vmatpush.msra.mxu0 0.0
    %264 = vmatpush.msra.mxu0 0.0
    %265 = vmatpush.msra.mxu0 0.0
    %266 = vmatpush.msra.mxu0 0.0
    %267 = vmatpush.msra.mxu0 0.0
    %268 = vmatpush.msra.mxu0 0.0
    %269 = vmatpush.msra.mxu0 0.0
    %270 = vmatpush.msra.mxu0 %v253
    %271 = vmatmul.f32.gmra.mxu0 %v247
    %v272 = vpop.f32.mrf.mxu0
    %v273 = vadd.f32 0.0, %v272
    %274 = vmatmul.f32.gmra.mxu0 %v250
    %v275 = vpop.f32.mrf.mxu0
    %v276 = vadd.f32 0.0, %v275
    %277 = vdwg.mxu0
    %v278 = vadd.f32 %v240, %v273
    %v279 = vadd.f32 %v241, %v276
    %v280 = vld [vmem:[#allocation2 + $0xb] sm:$0xff]
    %v281 = vld [vmem:[#allocation2 + $0x13] sm:$0xff]
    %s282 = scalar_lea.vmem %s1, 24
    %v283 = vld [vmem:[%s282] sm:$0xf]
    %v285 = vsel %vm53, %v280, 0
    %v288 = vsel %vm53, %v281, 0
    %v291 = vsel %vm69, %v283, 0
    %293 = vmatpush.msra.mxu0 0.0
    %294 = vmatpush.msra.mxu0 0.0
    %295 = vmatpush.msra.mxu0 0.0
    %296 = vmatpush.msra.mxu0 0.0
    %297 = vmatpush.msra.mxu0 0.0
    %298 = vmatpush.msra.mxu0 0.0
    %299 = vmatpush.msra.mxu0 0.0
    %300 = vmatpush.msra.mxu0 0.0
    %301 = vmatpush.msra.mxu0 0.0
    %302 = vmatpush.msra.mxu0 0.0
    %303 = vmatpush.msra.mxu0 0.0
    %304 = vmatpush.msra.mxu0 0.0
    %305 = vmatpush.msra.mxu0 0.0
    %306 = vmatpush.msra.mxu0 0.0
    %307 = vmatpush.msra.mxu0 0.0
    %308 = vmatpush.msra.mxu0 %v291
    %309 = vmatmul.f32.gmra.mxu0 %v285
    %v310 = vpop.f32.mrf.mxu0
    %v311 = vadd.f32 0.0, %v310
    %312 = vmatmul.f32.gmra.mxu0 %v288
    %v313 = vpop.f32.mrf.mxu0
    %v314 = vadd.f32 0.0, %v313
    %315 = vdwg.mxu0
    %v316 = vadd.f32 %v278, %v311
    %v317 = vadd.f32 %v279, %v314
    %v318 = vld [vmem:[#allocation2 + $0xc] sm:$0xff]
    %v319 = vld [vmem:[#allocation2 + $0x14] sm:$0xff]
    %s320 = scalar_lea.vmem %s1, 28
    %v321 = vld [vmem:[%s320] sm:$0xf]
    %v323 = vsel %vm53, %v318, 0
    %v326 = vsel %vm53, %v319, 0
    %v329 = vsel %vm69, %v321, 0
    %331 = vmatpush.msra.mxu0 0.0
    %332 = vmatpush.msra.mxu0 0.0
    %333 = vmatpush.msra.mxu0 0.0
    %334 = vmatpush.msra.mxu0 0.0
    %335 = vmatpush.msra.mxu0 0.0
    %336 = vmatpush.msra.mxu0 0.0
    %337 = vmatpush.msra.mxu0 0.0
    %338 = vmatpush.msra.mxu0 0.0
    %339 = vmatpush.msra.mxu0 0.0
    %340 = vmatpush.msra.mxu0 0.0
    %341 = vmatpush.msra.mxu0 0.0
    %342 = vmatpush.msra.mxu0 0.0
    %343 = vmatpush.msra.mxu0 0.0
    %344 = vmatpush.msra.mxu0 0.0
    %345 = vmatpush.msra.mxu0 0.0
    %346 = vmatpush.msra.mxu0 %v329
    %347 = vmatmul.f32.gmra.mxu0 %v323
    %v348 = vpop.f32.mrf.mxu0
    %v349 = vadd.f32 0.0, %v348
    %350 = vmatmul.f32.gmra.mxu0 %v326
    %v351 = vpop.f32.mrf.mxu0
    %v352 = vadd.f32 0.0, %v351
    %353 = vdwg.mxu0
    %v354 = vadd.f32 %v316, %v349
    %v355 = vadd.f32 %v317, %v352
    %v356 = vld [vmem:[%s2] sm:$0x1]
    %v358 = vperm.slane %v356, 0
    %v360 = vadd.f32 %v354, %v358
    %v361 = vadd.f32 %v355, %v358
    %v362 = vmax.f32 %v360, 0.0
    %v363 = vmax.f32 %v361, 0.0
    %vm364 = vcmask 130048
    %365 = vst.msk [vmem:[#allocation2 + $0x8] sm:$0xff] %vm364, %v362
    %366 = vst.msk [vmem:[#allocation2 + $0x10] sm:$0xff] %vm364, %v363
    %v367 = vld [vmem:[#allocation2 + $0x6] sm:$0xff]
    %v368 = vld [vmem:[#allocation2 + $0xe] sm:$0xff]
    %v369 = vld [vmem:[%s3] sm:$0xff]
    %v370 = vld [vmem:[%s3 + $0x8] sm:$0xff]
    %v371 = vld [vmem:[#allocation2 + $0x7] sm:$0xff]
    %v372 = vld [vmem:[#allocation2 + $0xf] sm:$0xff]
    %s373 = scalar_lea.vmem %s3, 16
    %v374 = vld [vmem:[%s373] sm:$0xff]
    %v375 = vld [vmem:[%s373 + $0x8] sm:$0xff]
    %v377 = vsel %vm364, %v371, 0
    %v380 = vsel %vm364, %v372, 0
    %382 = vmatpush.msra.mxu0 0.0
    %383 = vmatpush.msra.mxu0 0.0
    %384 = vmatpush.msra.mxu0 0.0
    %385 = vmatpush.msra.mxu0 0.0
    %386 = vmatpush.msra.mxu0 0.0
    %387 = vmatpush.msra.mxu0 0.0
    %388 = vmatpush.msra.mxu0 0.0
    %389 = vmatpush.msra.mxu0 0.0
    %390 = vmatpush.msra.mxu0 0.0
    %391 = vmatpush.msra.mxu0 0.0
    %392 = vmatpush.msra.mxu0 0.0
    %393 = vmatpush.msra.mxu0 0.0
    %394 = vmatpush.msra.mxu0 0.0
    %395 = vmatpush.msra.mxu0 0.0
    %396 = vmatpush.msra.mxu0 %v375
    %397 = vmatpush.msra.mxu0 %v374
    %398 = vmatmul.f32.gmra.mxu0 %v377
    %v399 = vpop.f32.mrf.mxu0
    %v400 = vadd.f32 0.0, %v399
    %401 = vmatmul.f32.gmra.mxu0 %v380
    %v402 = vpop.f32.mrf.mxu0
    %v403 = vadd.f32 0.0, %v402
    %404 = vdwg.mxu0
    %v406 = vsel %vm364, %v367, 0
    %v409 = vsel %vm364, %v368, 0
    %411 = vmatpush.msra.mxu0 0.0
    %412 = vmatpush.msra.mxu0 0.0
    %413 = vmatpush.msra.mxu0 0.0
    %414 = vmatpush.msra.mxu0 0.0
    %415 = vmatpush.msra.mxu0 0.0
    %416 = vmatpush.msra.mxu0 0.0
    %417 = vmatpush.msra.mxu0 0.0
    %418 = vmatpush.msra.mxu0 0.0
    %419 = vmatpush.msra.mxu0 0.0
    %420 = vmatpush.msra.mxu0 0.0
    %421 = vmatpush.msra.mxu0 0.0
    %422 = vmatpush.msra.mxu0 0.0
    %423 = vmatpush.msra.mxu0 0.0
    %424 = vmatpush.msra.mxu0 0.0
    %425 = vmatpush.msra.mxu0 %v370
    %426 = vmatpush.msra.mxu0 %v369
    %427 = vmatmul.f32.gmra.mxu0 %v406
    %v428 = vpop.f32.mrf.mxu0
    %v429 = vadd.f32 %v400, %v428
    %430 = vmatmul.f32.gmra.mxu0 %v409
    %v431 = vpop.f32.mrf.mxu0
    %v432 = vadd.f32 %v403, %v431
    %433 = vdwg.mxu0
    %v434 = vld [vmem:[#allocation2 + $0x8] sm:$0xff]
    %v435 = vld [vmem:[#allocation2 + $0x10] sm:$0xff]
    %s436 = scalar_lea.vmem %s3, 32
    %v437 = vld [vmem:[%s436] sm:$0xff]
    %v438 = vld [vmem:[%s436 + $0x8] sm:$0xff]
    %v440 = vsel %vm364, %v434, 0
    %v443 = vsel %vm364, %v435, 0
    %445 = vmatpush.msra.mxu0 0.0
    %446 = vmatpush.msra.mxu0 0.0
    %447 = vmatpush.msra.mxu0 0.0
    %448 = vmatpush.msra.mxu0 0.0
    %449 = vmatpush.msra.mxu0 0.0
    %450 = vmatpush.msra.mxu0 0.0
    %451 = vmatpush.msra.mxu0 0.0
    %452 = vmatpush.msra.mxu0 0.0
    %453 = vmatpush.msra.mxu0 0.0
    %454 = vmatpush.msra.mxu0 0.0
    %455 = vmatpush.msra.mxu0 0.0
    %456 = vmatpush.msra.mxu0 0.0
    %457 = vmatpush.msra.mxu0 0.0
    %458 = vmatpush.msra.mxu0 0.0
    %459 = vmatpush.msra.mxu0 %v438
    %460 = vmatpush.msra.mxu0 %v437
    %461 = vmatmul.f32.gmra.mxu0 %v440
    %v462 = vpop.f32.mrf.mxu0
    %v463 = vadd.f32 0.0, %v462
    %464 = vmatmul.f32.gmra.mxu0 %v443
    %v465 = vpop.f32.mrf.mxu0
    %v466 = vadd.f32 0.0, %v465
    %467 = vdwg.mxu0
    %v468 = vadd.f32 %v429, %v463
    %v469 = vadd.f32 %v432, %v466
    %v470 = vld [vmem:[#allocation2 + $0x9] sm:$0xff]
    %v471 = vld [vmem:[#allocation2 + $0x11] sm:$0xff]
    %s472 = scalar_lea.vmem %s3, 48
    %v473 = vld [vmem:[%s472] sm:$0xff]
    %v474 = vld [vmem:[%s472 + $0x8] sm:$0xff]
    %v476 = vsel %vm364, %v470, 0
    %v479 = vsel %vm364, %v471, 0
    %481 = vmatpush.msra.mxu0 0.0
    %482 = vmatpush.msra.mxu0 0.0
    %483 = vmatpush.msra.mxu0 0.0
    %484 = vmatpush.msra.mxu0 0.0
    %485 = vmatpush.msra.mxu0 0.0
    %486 = vmatpush.msra.mxu0 0.0
    %487 = vmatpush.msra.mxu0 0.0
    %488 = vmatpush.msra.mxu0 0.0
    %489 = vmatpush.msra.mxu0 0.0
    %490 = vmatpush.msra.mxu0 0.0
    %491 = vmatpush.msra.mxu0 0.0
    %492 = vmatpush.msra.mxu0 0.0
    %493 = vmatpush.msra.mxu0 0.0
    %494 = vmatpush.msra.mxu0 0.0
    %495 = vmatpush.msra.mxu0 %v474
    %496 = vmatpush.msra.mxu0 %v473
    %497 = vmatmul.f32.gmra.mxu0 %v476
    %v498 = vpop.f32.mrf.mxu0
    %v499 = vadd.f32 0.0, %v498
    %500 = vmatmul.f32.gmra.mxu0 %v479
    %v501 = vpop.f32.mrf.mxu0
    %v502 = vadd.f32 0.0, %v501
    %503 = vdwg.mxu0
    %v504 = vadd.f32 %v468, %v499
    %v505 = vadd.f32 %v469, %v502
    %v506 = vld [vmem:[#allocation2 + $0xa] sm:$0xff]
    %v507 = vld [vmem:[#allocation2 + $0x12] sm:$0xff]
    %s508 = scalar_lea.vmem %s3, 64
    %v509 = vld [vmem:[%s508] sm:$0xff]
    %v510 = vld [vmem:[%s508 + $0x8] sm:$0xff]
    %v512 = vsel %vm364, %v506, 0
    %v515 = vsel %vm364, %v507, 0
    %517 = vmatpush.msra.mxu0 0.0
    %518 = vmatpush.msra.mxu0 0.0
    %519 = vmatpush.msra.mxu0 0.0
    %520 = vmatpush.msra.mxu0 0.0
    %521 = vmatpush.msra.mxu0 0.0
    %522 = vmatpush.msra.mxu0 0.0
    %523 = vmatpush.msra.mxu0 0.0
    %524 = vmatpush.msra.mxu0 0.0
    %525 = vmatpush.msra.mxu0 0.0
    %526 = vmatpush.msra.mxu0 0.0
    %527 = vmatpush.msra.mxu0 0.0
    %528 = vmatpush.msra.mxu0 0.0
    %529 = vmatpush.msra.mxu0 0.0
    %530 = vmatpush.msra.mxu0 0.0
    %531 = vmatpush.msra.mxu0 %v510
    %532 = vmatpush.msra.mxu0 %v509
    %533 = vmatmul.f32.gmra.mxu0 %v512
    %v534 = vpop.f32.mrf.mxu0
    %v535 = vadd.f32 0.0, %v534
    %536 = vmatmul.f32.gmra.mxu0 %v515
    %v537 = vpop.f32.mrf.mxu0
    %v538 = vadd.f32 0.0, %v537
    %539 = vdwg.mxu0
    %v540 = vadd.f32 %v504, %v535
    %v541 = vadd.f32 %v505, %v538
    %v542 = vld [vmem:[%s4] sm:$0x1]
    %v544 = vperm.slane %v542, 0
    %v546 = vadd.f32 %v540, %v544
    %v547 = vadd.f32 %v541, %v544
    %v548 = vmax.f32 %v546, 0.0
    %v549 = vmax.f32 %v547, 0.0
    %550 = vst.msk [vmem:[#allocation2 + $0x8] sm:$0xff] %vm42, %v548
    %551 = vst.msk [vmem:[#allocation2 + $0x10] sm:$0xff] %vm42, %v549
    %v552 = vld [vmem:[#allocation2 + $0x6] sm:$0xff]
    %v553 = vld [vmem:[#allocation2 + $0xe] sm:$0xff]
    %v554 = vld [vmem:[%s5] sm:$0xff]
    %v555 = vld [vmem:[%s5 + $0x8] sm:$0xff]
    %v556 = vld [vmem:[%s5 + $0x10] sm:$0xff]
    %v557 = vld [vmem:[%s5 + $0x18] sm:$0xff]
    %v558 = vld [vmem:[#allocation2 + $0x7] sm:$0xff]
    %v559 = vld [vmem:[#allocation2 + $0xf] sm:$0xff]
    %s560 = scalar_lea.vmem %s5, 32
    %v561 = vld [vmem:[%s560] sm:$0xff]
    %v562 = vld [vmem:[%s560 + $0x8] sm:$0xff]
    %v563 = vld [vmem:[%s560 + $0x10] sm:$0xff]
    %v564 = vld [vmem:[%s560 + $0x18] sm:$0xff]
    %v566 = vsel %vm42, %v558, 0
    %v569 = vsel %vm42, %v559, 0
    %571 = vmatpush.msra.mxu0 0.0
    %572 = vmatpush.msra.mxu0 0.0
    %573 = vmatpush.msra.mxu0 0.0
    %574 = vmatpush.msra.mxu0 0.0
    %575 = vmatpush.msra.mxu0 0.0
    %576 = vmatpush.msra.mxu0 0.0
    %577 = vmatpush.msra.mxu0 0.0
    %578 = vmatpush.msra.mxu0 0.0
    %579 = vmatpush.msra.mxu0 0.0
    %580 = vmatpush.msra.mxu0 0.0
    %581 = vmatpush.msra.mxu0 0.0
    %582 = vmatpush.msra.mxu0 0.0
    %583 = vmatpush.msra.mxu0 %v564
    %584 = vmatpush.msra.mxu0 %v563
    %585 = vmatpush.msra.mxu0 %v562
    %586 = vmatpush.msra.mxu0 %v561
    %587 = vmatmul.f32.gmra.mxu0 %v566
    %v588 = vpop.f32.mrf.mxu0
    %v589 = vadd.f32 0.0, %v588
    %590 = vmatmul.f32.gmra.mxu0 %v569
    %v591 = vpop.f32.mrf.mxu0
    %v592 = vadd.f32 0.0, %v591
    %593 = vdwg.mxu0
    %v595 = vsel %vm42, %v552, 0
    %v598 = vsel %vm42, %v553, 0
    %600 = vmatpush.msra.mxu0 0.0
    %601 = vmatpush.msra.mxu0 0.0
    %602 = vmatpush.msra.mxu0 0.0
    %603 = vmatpush.msra.mxu0 0.0
    %604 = vmatpush.msra.mxu0 0.0
    %605 = vmatpush.msra.mxu0 0.0
    %606 = vmatpush.msra.mxu0 0.0
    %607 = vmatpush.msra.mxu0 0.0
    %608 = vmatpush.msra.mxu0 0.0
    %609 = vmatpush.msra.mxu0 0.0
    %610 = vmatpush.msra.mxu0 0.0
    %611 = vmatpush.msra.mxu0 0.0
    %612 = vmatpush.msra.mxu0 %v557
    %613 = vmatpush.msra.mxu0 %v556
    %614 = vmatpush.msra.mxu0 %v555
    %615 = vmatpush.msra.mxu0 %v554
    %616 = vmatmul.f32.gmra.mxu0 %v595
    %v617 = vpop.f32.mrf.mxu0
    %v618 = vadd.f32 %v589, %v617
    %619 = vmatmul.f32.gmra.mxu0 %v598
    %v620 = vpop.f32.mrf.mxu0
    %v621 = vadd.f32 %v592, %v620
    %622 = vdwg.mxu0
    %v623 = vld [vmem:[#allocation2 + $0x8] sm:$0xff]
    %v624 = vld [vmem:[#allocation2 + $0x10] sm:$0xff]
    %s625 = scalar_lea.vmem %s5, 64
    %v626 = vld [vmem:[%s625] sm:$0xff]
    %v627 = vld [vmem:[%s625 + $0x8] sm:$0xff]
    %v628 = vld [vmem:[%s625 + $0x10] sm:$0xff]
    %v629 = vld [vmem:[%s625 + $0x18] sm:$0xff]
    %v631 = vsel %vm42, %v623, 0
    %v634 = vsel %vm42, %v624, 0
    %636 = vmatpush.msra.mxu0 0.0
    %637 = vmatpush.msra.mxu0 0.0
    %638 = vmatpush.msra.mxu0 0.0
    %639 = vmatpush.msra.mxu0 0.0
    %640 = vmatpush.msra.mxu0 0.0
    %641 = vmatpush.msra.mxu0 0.0
    %642 = vmatpush.msra.mxu0 0.0
    %643 = vmatpush.msra.mxu0 0.0
    %644 = vmatpush.msra.mxu0 0.0
    %645 = vmatpush.msra.mxu0 0.0
    %646 = vmatpush.msra.mxu0 0.0
    %647 = vmatpush.msra.mxu0 0.0
    %648 = vmatpush.msra.mxu0 %v629
    %649 = vmatpush.msra.mxu0 %v628
    %650 = vmatpush.msra.mxu0 %v627
    %651 = vmatpush.msra.mxu0 %v626
    %652 = vmatmul.f32.gmra.mxu0 %v631
    %v653 = vpop.f32.mrf.mxu0
    %v654 = vadd.f32 0.0, %v653
    %655 = vmatmul.f32.gmra.mxu0 %v634
    %v656 = vpop.f32.mrf.mxu0
    %v657 = vadd.f32 0.0, %v656
    %658 = vdwg.mxu0
    %v659 = vadd.f32 %v618, %v654
    %v660 = vadd.f32 %v621, %v657
    %v661 = vld [vmem:[#allocation2 + $0x9] sm:$0xff]
    %v662 = vld [vmem:[#allocation2 + $0x11] sm:$0xff]
    %s663 = scalar_lea.vmem %s5, 96
    %v664 = vld [vmem:[%s663] sm:$0xff]
    %v665 = vld [vmem:[%s663 + $0x8] sm:$0xff]
    %v666 = vld [vmem:[%s663 + $0x10] sm:$0xff]
    %v667 = vld [vmem:[%s663 + $0x18] sm:$0xff]
    %v669 = vsel %vm42, %v661, 0
    %v672 = vsel %vm42, %v662, 0
    %674 = vmatpush.msra.mxu0 0.0
    %675 = vmatpush.msra.mxu0 0.0
    %676 = vmatpush.msra.mxu0 0.0
    %677 = vmatpush.msra.mxu0 0.0
    %678 = vmatpush.msra.mxu0 0.0
    %679 = vmatpush.msra.mxu0 0.0
    %680 = vmatpush.msra.mxu0 0.0
    %681 = vmatpush.msra.mxu0 0.0
    %682 = vmatpush.msra.mxu0 0.0
    %683 = vmatpush.msra.mxu0 0.0
    %684 = vmatpush.msra.mxu0 0.0
    %685 = vmatpush.msra.mxu0 0.0
    %686 = vmatpush.msra.mxu0 %v667
    %687 = vmatpush.msra.mxu0 %v666
    %688 = vmatpush.msra.mxu0 %v665
    %689 = vmatpush.msra.mxu0 %v664
    %690 = vmatmul.f32.gmra.mxu0 %v669
    %v691 = vpop.f32.mrf.mxu0
    %v692 = vadd.f32 0.0, %v691
    %693 = vmatmul.f32.gmra.mxu0 %v672
    %v694 = vpop.f32.mrf.mxu0
    %v695 = vadd.f32 0.0, %v694
    %696 = vdwg.mxu0
    %v697 = vadd.f32 %v659, %v692
    %v698 = vadd.f32 %v660, %v695
    %v699 = vld [vmem:[#allocation2 + $0xa] sm:$0xff]
    %v700 = vld [vmem:[#allocation2 + $0x12] sm:$0xff]
    %s701 = scalar_lea.vmem %s5, 128
    %v702 = vld [vmem:[%s701] sm:$0xff]
    %v703 = vld [vmem:[%s701 + $0x8] sm:$0xff]
    %v704 = vld [vmem:[%s701 + $0x10] sm:$0xff]
    %v705 = vld [vmem:[%s701 + $0x18] sm:$0xff]
    %v707 = vsel %vm42, %v699, 0
    %v710 = vsel %vm42, %v700, 0
    %712 = vmatpush.msra.mxu0 0.0
    %713 = vmatpush.msra.mxu0 0.0
    %714 = vmatpush.msra.mxu0 0.0
    %715 = vmatpush.msra.mxu0 0.0
    %716 = vmatpush.msra.mxu0 0.0
    %717 = vmatpush.msra.mxu0 0.0
    %718 = vmatpush.msra.mxu0 0.0
    %719 = vmatpush.msra.mxu0 0.0
    %720 = vmatpush.msra.mxu0 0.0
    %721 = vmatpush.msra.mxu0 0.0
    %722 = vmatpush.msra.mxu0 0.0
    %723 = vmatpush.msra.mxu0 0.0
    %724 = vmatpush.msra.mxu0 %v705
    %725 = vmatpush.msra.mxu0 %v704
    %726 = vmatpush.msra.mxu0 %v703
    %727 = vmatpush.msra.mxu0 %v702
    %728 = vmatmul.f32.gmra.mxu0 %v707
    %v729 = vpop.f32.mrf.mxu0
    %v730 = vadd.f32 0.0, %v729
    %731 = vmatmul.f32.gmra.mxu0 %v710
    %v732 = vpop.f32.mrf.mxu0
    %v733 = vadd.f32 0.0, %v732
    %734 = vdwg.mxu0
    %v735 = vadd.f32 %v697, %v730
    %v736 = vadd.f32 %v698, %v733
    %v737 = vld [vmem:[%s6] sm:$0x1]
    %v739 = vperm.slane %v737, 0
    %v741 = vadd.f32 %v735, %v739
    %v742 = vadd.f32 %v736, %v739
    %v743 = vmax.f32 %v741, 0.0
    %v744 = vmax.f32 %v742, 0.0
    %745 = vst.msk [vmem:[#allocation2 + $0x8] sm:$0xff] %vm42, %v743
    %746 = vst.msk [vmem:[#allocation2 + $0x10] sm:$0xff] %vm42, %v744
    %v747 = vld [vmem:[#allocation2 + $0x6] sm:$0xff]
    %v748 = vld [vmem:[#allocation2 + $0xe] sm:$0xff]
    %v749 = vld [vmem:[%s7] sm:$0xff]
    %v750 = vld [vmem:[%s7 + $0x8] sm:$0xff]
    %v751 = vld [vmem:[%s7 + $0x10] sm:$0xff]
    %v752 = vld [vmem:[%s7 + $0x18] sm:$0xff]
    %v753 = vld [vmem:[#allocation2 + $0x7] sm:$0xff]
    %v754 = vld [vmem:[#allocation2 + $0xf] sm:$0xff]
    %s755 = scalar_lea.vmem %s7, 32
    %v756 = vld [vmem:[%s755] sm:$0xff]
    %v757 = vld [vmem:[%s755 + $0x8] sm:$0xff]
    %v758 = vld [vmem:[%s755 + $0x10] sm:$0xff]
    %v759 = vld [vmem:[%s755 + $0x18] sm:$0xff]
    %v761 = vsel %vm42, %v753, 0
    %v764 = vsel %vm42, %v754, 0
    %766 = vmatpush.msra.mxu0 0.0
    %767 = vmatpush.msra.mxu0 0.0
    %768 = vmatpush.msra.mxu0 0.0
    %769 = vmatpush.msra.mxu0 0.0
    %770 = vmatpush.msra.mxu0 0.0
    %771 = vmatpush.msra.mxu0 0.0
    %772 = vmatpush.msra.mxu0 0.0
    %773 = vmatpush.msra.mxu0 0.0
    %774 = vmatpush.msra.mxu0 0.0
    %775 = vmatpush.msra.mxu0 0.0
    %776 = vmatpush.msra.mxu0 0.0
    %777 = vmatpush.msra.mxu0 0.0
    %778 = vmatpush.msra.mxu0 %v759
    %779 = vmatpush.msra.mxu0 %v758
    %780 = vmatpush.msra.mxu0 %v757
    %781 = vmatpush.msra.mxu0 %v756
    %782 = vmatmul.f32.gmra.mxu0 %v761
    %v783 = vpop.f32.mrf.mxu0
    %v784 = vadd.f32 0.0, %v783
    %785 = vmatmul.f32.gmra.mxu0 %v764
    %v786 = vpop.f32.mrf.mxu0
    %v787 = vadd.f32 0.0, %v786
    %788 = vdwg.mxu0
    %v790 = vsel %vm42, %v747, 0
    %v793 = vsel %vm42, %v748, 0
    %795 = vmatpush.msra.mxu0 0.0
    %796 = vmatpush.msra.mxu0 0.0
    %797 = vmatpush.msra.mxu0 0.0
    %798 = vmatpush.msra.mxu0 0.0
    %799 = vmatpush.msra.mxu0 0.0
    %800 = vmatpush.msra.mxu0 0.0
    %801 = vmatpush.msra.mxu0 0.0
    %802 = vmatpush.msra.mxu0 0.0
    %803 = vmatpush.msra.mxu0 0.0
    %804 = vmatpush.msra.mxu0 0.0
    %805 = vmatpush.msra.mxu0 0.0
    %806 = vmatpush.msra.mxu0 0.0
    %807 = vmatpush.msra.mxu0 %v752
    %808 = vmatpush.msra.mxu0 %v751
    %809 = vmatpush.msra.mxu0 %v750
    %810 = vmatpush.msra.mxu0 %v749
    %811 = vmatmul.f32.gmra.mxu0 %v790
    %v812 = vpop.f32.mrf.mxu0
    %v813 = vadd.f32 %v784, %v812
    %814 = vmatmul.f32.gmra.mxu0 %v793
    %v815 = vpop.f32.mrf.mxu0
    %v816 = vadd.f32 %v787, %v815
    %817 = vdwg.mxu0
    %v818 = vld [vmem:[#allocation2 + $0x8] sm:$0xff]
    %v819 = vld [vmem:[#allocation2 + $0x10] sm:$0xff]
    %s820 = scalar_lea.vmem %s7, 64
    %v821 = vld [vmem:[%s820] sm:$0xff]
    %v822 = vld [vmem:[%s820 + $0x8] sm:$0xff]
    %v823 = vld [vmem:[%s820 + $0x10] sm:$0xff]
    %v824 = vld [vmem:[%s820 + $0x18] sm:$0xff]
    %v826 = vsel %vm42, %v818, 0
    %v829 = vsel %vm42, %v819, 0
    %831 = vmatpush.msra.mxu0 0.0
    %832 = vmatpush.msra.mxu0 0.0
    %833 = vmatpush.msra.mxu0 0.0
    %834 = vmatpush.msra.mxu0 0.0
    %835 = vmatpush.msra.mxu0 0.0
    %836 = vmatpush.msra.mxu0 0.0
    %837 = vmatpush.msra.mxu0 0.0
    %838 = vmatpush.msra.mxu0 0.0
    %839 = vmatpush.msra.mxu0 0.0
    %840 = vmatpush.msra.mxu0 0.0
    %841 = vmatpush.msra.mxu0 0.0
    %842 = vmatpush.msra.mxu0 0.0
    %843 = vmatpush.msra.mxu0 %v824
    %844 = vmatpush.msra.mxu0 %v823
    %845 = vmatpush.msra.mxu0 %v822
    %846 = vmatpush.msra.mxu0 %v821
    %847 = vmatmul.f32.gmra.mxu0 %v826
    %v848 = vpop.f32.mrf.mxu0
    %v849 = vadd.f32 0.0, %v848
    %850 = vmatmul.f32.gmra.mxu0 %v829
    %v851 = vpop.f32.mrf.mxu0
    %v852 = vadd.f32 0.0, %v851
    %853 = vdwg.mxu0
    %v854 = vadd.f32 %v813, %v849
    %v855 = vadd.f32 %v816, %v852
    %v856 = vld [vmem:[#allocation2 + $0x9] sm:$0xff]
    %v857 = vld [vmem:[#allocation2 + $0x11] sm:$0xff]
    %s858 = scalar_lea.vmem %s7, 96
    %v859 = vld [vmem:[%s858] sm:$0xff]
    %v860 = vld [vmem:[%s858 + $0x8] sm:$0xff]
    %v861 = vld [vmem:[%s858 + $0x10] sm:$0xff]
    %v862 = vld [vmem:[%s858 + $0x18] sm:$0xff]
    %v864 = vsel %vm42, %v856, 0
    %v867 = vsel %vm42, %v857, 0
    %869 = vmatpush.msra.mxu0 0.0
    %870 = vmatpush.msra.mxu0 0.0
    %871 = vmatpush.msra.mxu0 0.0
    %872 = vmatpush.msra.mxu0 0.0
    %873 = vmatpush.msra.mxu0 0.0
    %874 = vmatpush.msra.mxu0 0.0
    %875 = vmatpush.msra.mxu0 0.0
    %876 = vmatpush.msra.mxu0 0.0
    %877 = vmatpush.msra.mxu0 0.0
    %878 = vmatpush.msra.mxu0 0.0
    %879 = vmatpush.msra.mxu0 0.0
    %880 = vmatpush.msra.mxu0 0.0
    %881 = vmatpush.msra.mxu0 %v862
    %882 = vmatpush.msra.mxu0 %v861
    %883 = vmatpush.msra.mxu0 %v860
    %884 = vmatpush.msra.mxu0 %v859
    %885 = vmatmul.f32.gmra.mxu0 %v864
    %v886 = vpop.f32.mrf.mxu0
    %v887 = vadd.f32 0.0, %v886
    %888 = vmatmul.f32.gmra.mxu0 %v867
    %v889 = vpop.f32.mrf.mxu0
    %v890 = vadd.f32 0.0, %v889
    %891 = vdwg.mxu0
    %v892 = vadd.f32 %v854, %v887
    %v893 = vadd.f32 %v855, %v890
    %v894 = vld [vmem:[#allocation2 + $0xa] sm:$0xff]
    %v895 = vld [vmem:[#allocation2 + $0x12] sm:$0xff]
    %s896 = scalar_lea.vmem %s7, 128
    %v897 = vld [vmem:[%s896] sm:$0xff]
    %v898 = vld [vmem:[%s896 + $0x8] sm:$0xff]
    %v899 = vld [vmem:[%s896 + $0x10] sm:$0xff]
    %v900 = vld [vmem:[%s896 + $0x18] sm:$0xff]
    %v902 = vsel %vm42, %v894, 0
    %v905 = vsel %vm42, %v895, 0
    %907 = vmatpush.msra.mxu0 0.0
    %908 = vmatpush.msra.mxu0 0.0
    %909 = vmatpush.msra.mxu0 0.0
    %910 = vmatpush.msra.mxu0 0.0
    %911 = vmatpush.msra.mxu0 0.0
    %912 = vmatpush.msra.mxu0 0.0
    %913 = vmatpush.msra.mxu0 0.0
    %914 = vmatpush.msra.mxu0 0.0
    %915 = vmatpush.msra.mxu0 0.0
    %916 = vmatpush.msra.mxu0 0.0
    %917 = vmatpush.msra.mxu0 0.0
    %918 = vmatpush.msra.mxu0 0.0
    %919 = vmatpush.msra.mxu0 %v900
    %920 = vmatpush.msra.mxu0 %v899
    %921 = vmatpush.msra.mxu0 %v898
    %922 = vmatpush.msra.mxu0 %v897
    %923 = vmatmul.f32.gmra.mxu0 %v902
    %v924 = vpop.f32.mrf.mxu0
    %v925 = vadd.f32 0.0, %v924
    %926 = vmatmul.f32.gmra.mxu0 %v905
    %v927 = vpop.f32.mrf.mxu0
    %v928 = vadd.f32 0.0, %v927
    %929 = vdwg.mxu0
    %v930 = vadd.f32 %v892, %v925
    %v931 = vadd.f32 %v893, %v928
    %v932 = vld [vmem:[%s8] sm:$0x1]
    %v934 = vperm.slane %v932, 0
    %v936 = vadd.f32 %v930, %v934
    %v937 = vadd.f32 %v931, %v934
    %v938 = vmax.f32 %v936, 0.0
    %v939 = vmax.f32 %v937, 0.0
    %v940 = vsel %vm364, %v938, 0.0
    %v941 = vsel %vm364, %v939, 0.0
    %v942 = vadd.f32 %v940, %v941
    %v943 = vrot.slane %v942, 4
    %v944 = vadd.f32 %v942, %v943
    %v945 = vrot.slane %v944, 2
    %v946 = vadd.f32 %v944, %v945
    %v947 = vrot.slane %v946, 1
    %v948 = vadd.f32 %v946, %v947
    %v949 = vrcp.pop 16.0
    %v950 = vmul.f32 16.0, %v949
    %v951 = vsub.f32 1.0, %v950
    %v952 = vmul.f32 %v949, %v951
    %v953 = vadd.f32 %v949, %v952
    %vm954 = vweird.f32 %v949
    %v955 = vsel %vm954, %v949, %v953
    %v956 = vmul.f32 %v948, %v955
    %vm957 = vcmask 122880
    %958 = vst.msk [vmem:[#allocation3] sm:$0x1] %vm957, %v956
    %s959 = scalar_lea.vmem %s0, 16
    %v960 = vld [vmem:[%s959] sm:$0xff]
    %v961 = vld [vmem:[%s959 + $0x8] sm:$0xff]
    %s962 = scalar_lea.vmem [#allocation2], 32
    %963 = vst.msk [vmem:[%s962 + $0x8] sm:$0xff] %vm53, %v960
    %964 = vst.msk [vmem:[%s962 + $0x10] sm:$0xff] %vm53, %v961
    %v965 = vld [vmem:[%s962 + $0x5] sm:$0xff]
    %v966 = vld [vmem:[%s962 + $0xd] sm:$0xff]
    %v967 = vld [vmem:[%s1] sm:$0xf]
    %v968 = vld [vmem:[%s962 + $0x6] sm:$0xff]
    %v969 = vld [vmem:[%s962 + $0xe] sm:$0xff]
    %v970 = vld [vmem:[%s61] sm:$0xf]
    %v972 = vsel %vm53, %v968, 0
    %v975 = vsel %vm53, %v969, 0
    %v978 = vsel %vm69, %v970, 0
    %980 = vmatpush.msra.mxu0 0.0
    %981 = vmatpush.msra.mxu0 0.0
    %982 = vmatpush.msra.mxu0 0.0
    %983 = vmatpush.msra.mxu0 0.0
    %984 = vmatpush.msra.mxu0 0.0
    %985 = vmatpush.msra.mxu0 0.0
    %986 = vmatpush.msra.mxu0 0.0
    %987 = vmatpush.msra.mxu0 0.0
    %988 = vmatpush.msra.mxu0 0.0
    %989 = vmatpush.msra.mxu0 0.0
    %990 = vmatpush.msra.mxu0 0.0
    %991 = vmatpush.msra.mxu0 0.0
    %992 = vmatpush.msra.mxu0 0.0
    %993 = vmatpush.msra.mxu0 0.0
    %994 = vmatpush.msra.mxu0 0.0
    %995 = vmatpush.msra.mxu0 %v978
    %996 = vmatmul.f32.gmra.mxu0 %v972
    %v997 = vpop.f32.mrf.mxu0
    %v998 = vadd.f32 0.0, %v997
    %999 = vmatmul.f32.gmra.mxu0 %v975
    %v1000 = vpop.f32.mrf.mxu0
    %v1001 = vadd.f32 0.0, %v1000
    %1002 = vdwg.mxu0
    %v1004 = vsel %vm53, %v965, 0
    %v1007 = vsel %vm53, %v966, 0
    %v1010 = vsel %vm69, %v967, 0
    %1012 = vmatpush.msra.mxu0 0.0
    %1013 = vmatpush.msra.mxu0 0.0
    %1014 = vmatpush.msra.mxu0 0.0
    %1015 = vmatpush.msra.mxu0 0.0
    %1016 = vmatpush.msra.mxu0 0.0
    %1017 = vmatpush.msra.mxu0 0.0
    %1018 = vmatpush.msra.mxu0 0.0
    %1019 = vmatpush.msra.mxu0 0.0
    %1020 = vmatpush.msra.mxu0 0.0
    %1021 = vmatpush.msra.mxu0 0.0
    %1022 = vmatpush.msra.mxu0 0.0
    %1023 = vmatpush.msra.mxu0 0.0
    %1024 = vmatpush.msra.mxu0 0.0
    %1025 = vmatpush.msra.mxu0 0.0
    %1026 = vmatpush.msra.mxu0 0.0
    %1027 = vmatpush.msra.mxu0 %v1010
    %1028 = vmatmul.f32.gmra.mxu0 %v1004
    %v1029 = vpop.f32.mrf.mxu0
    %v1030 = vadd.f32 %v998, %v1029
    %1031 = vmatmul.f32.gmra.mxu0 %v1007
    %v1032 = vpop.f32.mrf.mxu0
    %v1033 = vadd.f32 %v1001, %v1032
    %1034 = vdwg.mxu0
    %v1035 = vld [vmem:[%s962 + $0x7] sm:$0xff]
    %v1036 = vld [vmem:[%s962 + $0xf] sm:$0xff]
    %v1037 = vld [vmem:[%s130] sm:$0xf]
    %v1039 = vsel %vm53, %v1035, 0
    %v1042 = vsel %vm53, %v1036, 0
    %v1045 = vsel %vm69, %v1037, 0
    %1047 = vmatpush.msra.mxu0 0.0
    %1048 = vmatpush.msra.mxu0 0.0
    %1049 = vmatpush.msra.mxu0 0.0
    %1050 = vmatpush.msra.mxu0 0.0
    %1051 = vmatpush.msra.mxu0 0.0
    %1052 = vmatpush.msra.mxu0 0.0
    %1053 = vmatpush.msra.mxu0 0.0
    %1054 = vmatpush.msra.mxu0 0.0
    %1055 = vmatpush.msra.mxu0 0.0
    %1056 = vmatpush.msra.mxu0 0.0
    %1057 = vmatpush.msra.mxu0 0.0
    %1058 = vmatpush.msra.mxu0 0.0
    %1059 = vmatpush.msra.mxu0 0.0
    %1060 = vmatpush.msra.mxu0 0.0
    %1061 = vmatpush.msra.mxu0 0.0
    %1062 = vmatpush.msra.mxu0 %v1045
    %1063 = vmatmul.f32.gmra.mxu0 %v1039
    %v1064 = vpop.f32.mrf.mxu0
    %v1065 = vadd.f32 0.0, %v1064
    %1066 = vmatmul.f32.gmra.mxu0 %v1042
    %v1067 = vpop.f32.mrf.mxu0
    %v1068 = vadd.f32 0.0, %v1067
    %1069 = vdwg.mxu0
    %v1070 = vadd.f32 %v1030, %v1065
    %v1071 = vadd.f32 %v1033, %v1068
    %v1072 = vld [vmem:[%s962 + $0x8] sm:$0xff]
    %v1073 = vld [vmem:[%s962 + $0x10] sm:$0xff]
    %v1074 = vld [vmem:[%s168] sm:$0xf]
    %v1076 = vsel %vm53, %v1072, 0
    %v1079 = vsel %vm53, %v1073, 0
    %v1082 = vsel %vm69, %v1074, 0
    %1084 = vmatpush.msra.mxu0 0.0
    %1085 = vmatpush.msra.mxu0 0.0
    %1086 = vmatpush.msra.mxu0 0.0
    %1087 = vmatpush.msra.mxu0 0.0
    %1088 = vmatpush.msra.mxu0 0.0
    %1089 = vmatpush.msra.mxu0 0.0
    %1090 = vmatpush.msra.mxu0 0.0
    %1091 = vmatpush.msra.mxu0 0.0
    %1092 = vmatpush.msra.mxu0 0.0
    %1093 = vmatpush.msra.mxu0 0.0
    %1094 = vmatpush.msra.mxu0 0.0
    %1095 = vmatpush.msra.mxu0 0.0
    %1096 = vmatpush.msra.mxu0 0.0
    %1097 = vmatpush.msra.mxu0 0.0
    %1098 = vmatpush.msra.mxu0 0.0
    %1099 = vmatpush.msra.mxu0 %v1082
    %1100 = vmatmul.f32.gmra.mxu0 %v1076
    %v1101 = vpop.f32.mrf.mxu0
    %v1102 = vadd.f32 0.0, %v1101
    %1103 = vmatmul.f32.gmra.mxu0 %v1079
    %v1104 = vpop.f32.mrf.mxu0
    %v1105 = vadd.f32 0.0, %v1104
    %1106 = vdwg.mxu0
    %v1107 = vadd.f32 %v1070, %v1102
    %v1108 = vadd.f32 %v1071, %v1105
    %v1109 = vld [vmem:[%s962 + $0x9] sm:$0xff]
    %v1110 = vld [vmem:[%s962 + $0x11] sm:$0xff]
    %v1111 = vld [vmem:[%s206] sm:$0xf]
    %v1113 = vsel %vm53, %v1109, 0
    %v1116 = vsel %vm53, %v1110, 0
    %v1119 = vsel %vm69, %v1111, 0
    %1121 = vmatpush.msra.mxu0 0.0
    %1122 = vmatpush.msra.mxu0 0.0
    %1123 = vmatpush.msra.mxu0 0.0
    %1124 = vmatpush.msra.mxu0 0.0
    %1125 = vmatpush.msra.mxu0 0.0
    %1126 = vmatpush.msra.mxu0 0.0
    %1127 = vmatpush.msra.mxu0 0.0
    %1128 = vmatpush.msra.mxu0 0.0
    %1129 = vmatpush.msra.mxu0 0.0
    %1130 = vmatpush.msra.mxu0 0.0
    %1131 = vmatpush.msra.mxu0 0.0
    %1132 = vmatpush.msra.mxu0 0.0
    %1133 = vmatpush.msra.mxu0 0.0
    %1134 = vmatpush.msra.mxu0 0.0
    %1135 = vmatpush.msra.mxu0 0.0
    %1136 = vmatpush.msra.mxu0 %v1119
    %1137 = vmatmul.f32.gmra.mxu0 %v1113
    %v1138 = vpop.f32.mrf.mxu0
    %v1139 = vadd.f32 0.0, %v1138
    %1140 = vmatmul.f32.gmra.mxu0 %v1116
    %v1141 = vpop.f32.mrf.mxu0
    %v1142 = vadd.f32 0.0, %v1141
    %1143 = vdwg.mxu0
    %v1144 = vadd.f32 %v1107, %v1139
    %v1145 = vadd.f32 %v1108, %v1142
    %v1146 = vld [vmem:[%s962 + $0xa] sm:$0xff]
    %v1147 = vld [vmem:[%s962 + $0x12] sm:$0xff]
    %v1148 = vld [vmem:[%s244] sm:$0xf]
    %v1150 = vsel %vm53, %v1146, 0
    %v1153 = vsel %vm53, %v1147, 0
    %v1156 = vsel %vm69, %v1148, 0
    %1158 = vmatpush.msra.mxu0 0.0
    %1159 = vmatpush.msra.mxu0 0.0
    %1160 = vmatpush.msra.mxu0 0.0
    %1161 = vmatpush.msra.mxu0 0.0
    %1162 = vmatpush.msra.mxu0 0.0
    %1163 = vmatpush.msra.mxu0 0.0
    %1164 = vmatpush.msra.mxu0 0.0
    %1165 = vmatpush.msra.mxu0 0.0
    %1166 = vmatpush.msra.mxu0 0.0
    %1167 = vmatpush.msra.mxu0 0.0
    %1168 = vmatpush.msra.mxu0 0.0
    %1169 = vmatpush.msra.mxu0 0.0
    %1170 = vmatpush.msra.mxu0 0.0
    %1171 = vmatpush.msra.mxu0 0.0
    %1172 = vmatpush.msra.mxu0 0.0
    %1173 = vmatpush.msra.mxu0 %v1156
    %1174 = vmatmul.f32.gmra.mxu0 %v1150
    %v1175 = vpop.f32.mrf.mxu0
    %v1176 = vadd.f32 0.0, %v1175
    %1177 = vmatmul.f32.gmra.mxu0 %v1153
    %v1178 = vpop.f32.mrf.mxu0
    %v1179 = vadd.f32 0.0, %v1178
    %1180 = vdwg.mxu0
    %v1181 = vadd.f32 %v1144, %v1176
    %v1182 = vadd.f32 %v1145, %v1179
    %v1183 = vld [vmem:[%s962 + $0xb] sm:$0xff]
    %v1184 = vld [vmem:[%s962 + $0x13] sm:$0xff]
    %v1185 = vld [vmem:[%s282] sm:$0xf]
    %v1187 = vsel %vm53, %v1183, 0
    %v1190 = vsel %vm53, %v1184, 0
    %v1193 = vsel %vm69, %v1185, 0
    %1195 = vmatpush.msra.mxu0 0.0
    %1196 = vmatpush.msra.mxu0 0.0
    %1197 = vmatpush.msra.mxu0 0.0
    %1198 = vmatpush.msra.mxu0 0.0
    %1199 = vmatpush.msra.mxu0 0.0
    %1200 = vmatpush.msra.mxu0 0.0
    %1201 = vmatpush.msra.mxu0 0.0
    %1202 = vmatpush.msra.mxu0 0.0
    %1203 = vmatpush.msra.mxu0 0.0
    %1204 = vmatpush.msra.mxu0 0.0
    %1205 = vmatpush.msra.mxu0 0.0
    %1206 = vmatpush.msra.mxu0 0.0
    %1207 = vmatpush.msra.mxu0 0.0
    %1208 = vmatpush.msra.mxu0 0.0
    %1209 = vmatpush.msra.mxu0 0.0
    %1210 = vmatpush.msra.mxu0 %v1193
    %1211 = vmatmul.f32.gmra.mxu0 %v1187
    %v1212 = vpop.f32.mrf.mxu0
    %v1213 = vadd.f32 0.0, %v1212
    %1214 = vmatmul.f32.gmra.mxu0 %v1190
    %v1215 = vpop.f32.mrf.mxu0
    %v1216 = vadd.f32 0.0, %v1215
    %1217 = vdwg.mxu0
    %v1218 = vadd.f32 %v1181, %v1213
    %v1219 = vadd.f32 %v1182, %v1216
    %v1220 = vld [vmem:[%s962 + $0xc] sm:$0xff]
    %v1221 = vld [vmem:[%s962 + $0x14] sm:$0xff]
    %v1222 = vld [vmem:[%s320] sm:$0xf]
    %v1224 = vsel %vm53, %v1220, 0
    %v1227 = vsel %vm53, %v1221, 0
    %v1230 = vsel %vm69, %v1222, 0
    %1232 = vmatpush.msra.mxu0 0.0
    %1233 = vmatpush.msra.mxu0 0.0
    %1234 = vmatpush.msra.mxu0 0.0
    %1235 = vmatpush.msra.mxu0 0.0
    %1236 = vmatpush.msra.mxu0 0.0
    %1237 = vmatpush.msra.mxu0 0.0
    %1238 = vmatpush.msra.mxu0 0.0
    %1239 = vmatpush.msra.mxu0 0.0
    %1240 = vmatpush.msra.mxu0 0.0
    %1241 = vmatpush.msra.mxu0 0.0
    %1242 = vmatpush.msra.mxu0 0.0
    %1243 = vmatpush.msra.mxu0 0.0
    %1244 = vmatpush.msra.mxu0 0.0
    %1245 = vmatpush.msra.mxu0 0.0
    %1246 = vmatpush.msra.mxu0 0.0
    %1247 = vmatpush.msra.mxu0 %v1230
    %1248 = vmatmul.f32.gmra.mxu0 %v1224
    %v1249 = vpop.f32.mrf.mxu0
    %v1250 = vadd.f32 0.0, %v1249
    %1251 = vmatmul.f32.gmra.mxu0 %v1227
    %v1252 = vpop.f32.mrf.mxu0
    %v1253 = vadd.f32 0.0, %v1252
    %1254 = vdwg.mxu0
    %v1255 = vadd.f32 %v1218, %v1250
    %v1256 = vadd.f32 %v1219, %v1253
    %v1257 = vld [vmem:[%s2] sm:$0x1]
    %v1259 = vperm.slane %v1257, 0
    %v1261 = vadd.f32 %v1255, %v1259
    %v1262 = vadd.f32 %v1256, %v1259
    %v1263 = vmax.f32 %v1261, 0.0
    %v1264 = vmax.f32 %v1262, 0.0
    %1265 = vst.msk [vmem:[%s962 + $0x8] sm:$0xff] %vm364, %v1263
    %1266 = vst.msk [vmem:[%s962 + $0x10] sm:$0xff] %vm364, %v1264
    %v1267 = vld [vmem:[%s962 + $0x6] sm:$0xff]
    %v1268 = vld [vmem:[%s962 + $0xe] sm:$0xff]
    %v1269 = vld [vmem:[%s3] sm:$0xff]
    %v1270 = vld [vmem:[%s3 + $0x8] sm:$0xff]
    %v1271 = vld [vmem:[%s962 + $0x7] sm:$0xff]
    %v1272 = vld [vmem:[%s962 + $0xf] sm:$0xff]
    %v1273 = vld [vmem:[%s373] sm:$0xff]
    %v1274 = vld [vmem:[%s373 + $0x8] sm:$0xff]
    %v1276 = vsel %vm364, %v1271, 0
    %v1279 = vsel %vm364, %v1272, 0
    %1281 = vmatpush.msra.mxu0 0.0
    %1282 = vmatpush.msra.mxu0 0.0
    %1283 = vmatpush.msra.mxu0 0.0
    %1284 = vmatpush.msra.mxu0 0.0
    %1285 = vmatpush.msra.mxu0 0.0
    %1286 = vmatpush.msra.mxu0 0.0
    %1287 = vmatpush.msra.mxu0 0.0
    %1288 = vmatpush.msra.mxu0 0.0
    %1289 = vmatpush.msra.mxu0 0.0
    %1290 = vmatpush.msra.mxu0 0.0
    %1291 = vmatpush.msra.mxu0 0.0
    %1292 = vmatpush.msra.mxu0 0.0
    %1293 = vmatpush.msra.mxu0 0.0
    %1294 = vmatpush.msra.mxu0 0.0
    %1295 = vmatpush.msra.mxu0 %v1274
    %1296 = vmatpush.msra.mxu0 %v1273
    %1297 = vmatmul.f32.gmra.mxu0 %v1276
    %v1298 = vpop.f32.mrf.mxu0
    %v1299 = vadd.f32 0.0, %v1298
    %1300 = vmatmul.f32.gmra.mxu0 %v1279
    %v1301 = vpop.f32.mrf.mxu0
    %v1302 = vadd.f32 0.0, %v1301
    %1303 = vdwg.mxu0
    %v1305 = vsel %vm364, %v1267, 0
    %v1308 = vsel %vm364, %v1268, 0
    %1310 = vmatpush.msra.mxu0 0.0
    %1311 = vmatpush.msra.mxu0 0.0
    %1312 = vmatpush.msra.mxu0 0.0
    %1313 = vmatpush.msra.mxu0 0.0
    %1314 = vmatpush.msra.mxu0 0.0
    %1315 = vmatpush.msra.mxu0 0.0
    %1316 = vmatpush.msra.mxu0 0.0
    %1317 = vmatpush.msra.mxu0 0.0
    %1318 = vmatpush.msra.mxu0 0.0
    %1319 = vmatpush.msra.mxu0 0.0
    %1320 = vmatpush.msra.mxu0 0.0
    %1321 = vmatpush.msra.mxu0 0.0
    %1322 = vmatpush.msra.mxu0 0.0
    %1323 = vmatpush.msra.mxu0 0.0
    %1324 = vmatpush.msra.mxu0 %v1270
    %1325 = vmatpush.msra.mxu0 %v1269
    %1326 = vmatmul.f32.gmra.mxu0 %v1305
    %v1327 = vpop.f32.mrf.mxu0
    %v1328 = vadd.f32 %v1299, %v1327
    %1329 = vmatmul.f32.gmra.mxu0 %v1308
    %v1330 = vpop.f32.mrf.mxu0
    %v1331 = vadd.f32 %v1302, %v1330
    %1332 = vdwg.mxu0
    %v1333 = vld [vmem:[%s962 + $0x8] sm:$0xff]
    %v1334 = vld [vmem:[%s962 + $0x10] sm:$0xff]
    %v1335 = vld [vmem:[%s436] sm:$0xff]
    %v1336 = vld [vmem:[%s436 + $0x8] sm:$0xff]
    %v1338 = vsel %vm364, %v1333, 0
    %v1341 = vsel %vm364, %v1334, 0
    %1343 = vmatpush.msra.mxu0 0.0
    %1344 = vmatpush.msra.mxu0 0.0
    %1345 = vmatpush.msra.mxu0 0.0
    %1346 = vmatpush.msra.mxu0 0.0
    %1347 = vmatpush.msra.mxu0 0.0
    %1348 = vmatpush.msra.mxu0 0.0
    %1349 = vmatpush.msra.mxu0 0.0
    %1350 = vmatpush.msra.mxu0 0.0
    %1351 = vmatpush.msra.mxu0 0.0
    %1352 = vmatpush.msra.mxu0 0.0
    %1353 = vmatpush.msra.mxu0 0.0
    %1354 = vmatpush.msra.mxu0 0.0
    %1355 = vmatpush.msra.mxu0 0.0
    %1356 = vmatpush.msra.mxu0 0.0
    %1357 = vmatpush.msra.mxu0 %v1336
    %1358 = vmatpush.msra.mxu0 %v1335
    %1359 = vmatmul.f32.gmra.mxu0 %v1338
    %v1360 = vpop.f32.mrf.mxu0
    %v1361 = vadd.f32 0.0, %v1360
    %1362 = vmatmul.f32.gmra.mxu0 %v1341
    %v1363 = vpop.f32.mrf.mxu0
    %v1364 = vadd.f32 0.0, %v1363
    %1365 = vdwg.mxu0
    %v1366 = vadd.f32 %v1328, %v1361
    %v1367 = vadd.f32 %v1331, %v1364
    %v1368 = vld [vmem:[%s962 + $0x9] sm:$0xff]
    %v1369 = vld [vmem:[%s962 + $0x11] sm:$0xff]
    %v1370 = vld [vmem:[%s472] sm:$0xff]
    %v1371 = vld [vmem:[%s472 + $0x8] sm:$0xff]
    %v1373 = vsel %vm364, %v1368, 0
    %v1376 = vsel %vm364, %v1369, 0
    %1378 = vmatpush.msra.mxu0 0.0
    %1379 = vmatpush.msra.mxu0 0.0
    %1380 = vmatpush.msra.mxu0 0.0
    %1381 = vmatpush.msra.mxu0 0.0
    %1382 = vmatpush.msra.mxu0 0.0
    %1383 = vmatpush.msra.mxu0 0.0
    %1384 = vmatpush.msra.mxu0 0.0
    %1385 = vmatpush.msra.mxu0 0.0
    %1386 = vmatpush.msra.mxu0 0.0
    %1387 = vmatpush.msra.mxu0 0.0
    %1388 = vmatpush.msra.mxu0 0.0
    %1389 = vmatpush.msra.mxu0 0.0
    %1390 = vmatpush.msra.mxu0 0.0
    %1391 = vmatpush.msra.mxu0 0.0
    %1392 = vmatpush.msra.mxu0 %v1371
    %1393 = vmatpush.msra.mxu0 %v1370
    %1394 = vmatmul.f32.gmra.mxu0 %v1373
    %v1395 = vpop.f32.mrf.mxu0
    %v1396 = vadd.f32 0.0, %v1395
    %1397 = vmatmul.f32.gmra.mxu0 %v1376
    %v1398 = vpop.f32.mrf.mxu0
    %v1399 = vadd.f32 0.0, %v1398
    %1400 = vdwg.mxu0
    %v1401 = vadd.f32 %v1366, %v1396
    %v1402 = vadd.f32 %v1367, %v1399
    %v1403 = vld [vmem:[%s962 + $0xa] sm:$0xff]
    %v1404 = vld [vmem:[%s962 + $0x12] sm:$0xff]
    %v1405 = vld [vmem:[%s508] sm:$0xff]
    %v1406 = vld [vmem:[%s508 + $0x8] sm:$0xff]
    %v1408 = vsel %vm364, %v1403, 0
    %v1411 = vsel %vm364, %v1404, 0
    %1413 = vmatpush.msra.mxu0 0.0
    %1414 = vmatpush.msra.mxu0 0.0
    %1415 = vmatpush.msra.mxu0 0.0
    %1416 = vmatpush.msra.mxu0 0.0
    %1417 = vmatpush.msra.mxu0 0.0
    %1418 = vmatpush.msra.mxu0 0.0
    %1419 = vmatpush.msra.mxu0 0.0
    %1420 = vmatpush.msra.mxu0 0.0
    %1421 = vmatpush.msra.mxu0 0.0
    %1422 = vmatpush.msra.mxu0 0.0
    %1423 = vmatpush.msra.mxu0 0.0
    %1424 = vmatpush.msra.mxu0 0.0
    %1425 = vmatpush.msra.mxu0 0.0
    %1426 = vmatpush.msra.mxu0 0.0
    %1427 = vmatpush.msra.mxu0 %v1406
    %1428 = vmatpush.msra.mxu0 %v1405
    %1429 = vmatmul.f32.gmra.mxu0 %v1408
    %v1430 = vpop.f32.mrf.mxu0
    %v1431 = vadd.f32 0.0, %v1430
    %1432 = vmatmul.f32.gmra.mxu0 %v1411
    %v1433 = vpop.f32.mrf.mxu0
    %v1434 = vadd.f32 0.0, %v1433
    %1435 = vdwg.mxu0
    %v1436 = vadd.f32 %v1401, %v1431
    %v1437 = vadd.f32 %v1402, %v1434
    %v1438 = vld [vmem:[%s4] sm:$0x1]
    %v1440 = vperm.slane %v1438, 0
    %v1442 = vadd.f32 %v1436, %v1440
    %v1443 = vadd.f32 %v1437, %v1440
    %v1444 = vmax.f32 %v1442, 0.0
    %v1445 = vmax.f32 %v1443, 0.0
    %1446 = vst.msk [vmem:[%s962 + $0x8] sm:$0xff] %vm42, %v1444
    %1447 = vst.msk [vmem:[%s962 + $0x10] sm:$0xff] %vm42, %v1445
    %v1448 = vld [vmem:[%s962 + $0x6] sm:$0xff]
    %v1449 = vld [vmem:[%s962 + $0xe] sm:$0xff]
    %v1450 = vld [vmem:[%s5] sm:$0xff]
    %v1451 = vld [vmem:[%s5 + $0x8] sm:$0xff]
    %v1452 = vld [vmem:[%s5 + $0x10] sm:$0xff]
    %v1453 = vld [vmem:[%s5 + $0x18] sm:$0xff]
    %v1454 = vld [vmem:[%s962 + $0x7] sm:$0xff]
    %v1455 = vld [vmem:[%s962 + $0xf] sm:$0xff]
    %v1456 = vld [vmem:[%s560] sm:$0xff]
    %v1457 = vld [vmem:[%s560 + $0x8] sm:$0xff]
    %v1458 = vld [vmem:[%s560 + $0x10] sm:$0xff]
    %v1459 = vld [vmem:[%s560 + $0x18] sm:$0xff]
    %v1461 = vsel %vm42, %v1454, 0
    %v1464 = vsel %vm42, %v1455, 0
    %1466 = vmatpush.msra.mxu0 0.0
    %1467 = vmatpush.msra.mxu0 0.0
    %1468 = vmatpush.msra.mxu0 0.0
    %1469 = vmatpush.msra.mxu0 0.0
    %1470 = vmatpush.msra.mxu0 0.0
    %1471 = vmatpush.msra.mxu0 0.0
    %1472 = vmatpush.msra.mxu0 0.0
    %1473 = vmatpush.msra.mxu0 0.0
    %1474 = vmatpush.msra.mxu0 0.0
    %1475 = vmatpush.msra.mxu0 0.0
    %1476 = vmatpush.msra.mxu0 0.0
    %1477 = vmatpush.msra.mxu0 0.0
    %1478 = vmatpush.msra.mxu0 %v1459
    %1479 = vmatpush.msra.mxu0 %v1458
    %1480 = vmatpush.msra.mxu0 %v1457
    %1481 = vmatpush.msra.mxu0 %v1456
    %1482 = vmatmul.f32.gmra.mxu0 %v1461
    %v1483 = vpop.f32.mrf.mxu0
    %v1484 = vadd.f32 0.0, %v1483
    %1485 = vmatmul.f32.gmra.mxu0 %v1464
    %v1486 = vpop.f32.mrf.mxu0
    %v1487 = vadd.f32 0.0, %v1486
    %1488 = vdwg.mxu0
    %v1490 = vsel %vm42, %v1448, 0
    %v1493 = vsel %vm42, %v1449, 0
    %1495 = vmatpush.msra.mxu0 0.0
    %1496 = vmatpush.msra.mxu0 0.0
    %1497 = vmatpush.msra.mxu0 0.0
    %1498 = vmatpush.msra.mxu0 0.0
    %1499 = vmatpush.msra.mxu0 0.0
    %1500 = vmatpush.msra.mxu0 0.0
    %1501 = vmatpush.msra.mxu0 0.0
    %1502 = vmatpush.msra.mxu0 0.0
    %1503 = vmatpush.msra.mxu0 0.0
    %1504 = vmatpush.msra.mxu0 0.0
    %1505 = vmatpush.msra.mxu0 0.0
    %1506 = vmatpush.msra.mxu0 0.0
    %1507 = vmatpush.msra.mxu0 %v1453
    %1508 = vmatpush.msra.mxu0 %v1452
    %1509 = vmatpush.msra.mxu0 %v1451
    %1510 = vmatpush.msra.mxu0 %v1450
    %1511 = vmatmul.f32.gmra.mxu0 %v1490
    %v1512 = vpop.f32.mrf.mxu0
    %v1513 = vadd.f32 %v1484, %v1512
    %1514 = vmatmul.f32.gmra.mxu0 %v1493
    %v1515 = vpop.f32.mrf.mxu0
    %v1516 = vadd.f32 %v1487, %v1515
    %1517 = vdwg.mxu0
    %v1518 = vld [vmem:[%s962 + $0x8] sm:$0xff]
    %v1519 = vld [vmem:[%s962 + $0x10] sm:$0xff]
    %v1520 = vld [vmem:[%s625] sm:$0xff]
    %v1521 = vld [vmem:[%s625 + $0x8] sm:$0xff]
    %v1522 = vld [vmem:[%s625 + $0x10] sm:$0xff]
    %v1523 = vld [vmem:[%s625 + $0x18] sm:$0xff]
    %v1525 = vsel %vm42, %v1518, 0
    %v1528 = vsel %vm42, %v1519, 0
    %1530 = vmatpush.msra.mxu0 0.0
    %1531 = vmatpush.msra.mxu0 0.0
    %1532 = vmatpush.msra.mxu0 0.0
    %1533 = vmatpush.msra.mxu0 0.0
    %1534 = vmatpush.msra.mxu0 0.0
    %1535 = vmatpush.msra.mxu0 0.0
    %1536 = vmatpush.msra.mxu0 0.0
    %1537 = vmatpush.msra.mxu0 0.0
    %1538 = vmatpush.msra.mxu0 0.0
    %1539 = vmatpush.msra.mxu0 0.0
    %1540 = vmatpush.msra.mxu0 0.0
    %1541 = vmatpush.msra.mxu0 0.0
    %1542 = vmatpush.msra.mxu0 %v1523
    %1543 = vmatpush.msra.mxu0 %v1522
    %1544 = vmatpush.msra.mxu0 %v1521
    %1545 = vmatpush.msra.mxu0 %v1520
    %1546 = vmatmul.f32.gmra.mxu0 %v1525
    %v1547 = vpop.f32.mrf.mxu0
    %v1548 = vadd.f32 0.0, %v1547
    %1549 = vmatmul.f32.gmra.mxu0 %v1528
    %v1550 = vpop.f32.mrf.mxu0
    %v1551 = vadd.f32 0.0, %v1550
    %1552 = vdwg.mxu0
    %v1553 = vadd.f32 %v1513, %v1548
    %v1554 = vadd.f32 %v1516, %v1551
    %v1555 = vld [vmem:[%s962 + $0x9] sm:$0xff]
    %v1556 = vld [vmem:[%s962 + $0x11] sm:$0xff]
    %v1557 = vld [vmem:[%s663] sm:$0xff]
    %v1558 = vld [vmem:[%s663 + $0x8] sm:$0xff]
    %v1559 = vld [vmem:[%s663 + $0x10] sm:$0xff]
    %v1560 = vld [vmem:[%s663 + $0x18] sm:$0xff]
    %v1562 = vsel %vm42, %v1555, 0
    %v1565 = vsel %vm42, %v1556, 0
    %1567 = vmatpush.msra.mxu0 0.0
    %1568 = vmatpush.msra.mxu0 0.0
    %1569 = vmatpush.msra.mxu0 0.0
    %1570 = vmatpush.msra.mxu0 0.0
    %1571 = vmatpush.msra.mxu0 0.0
    %1572 = vmatpush.msra.mxu0 0.0
    %1573 = vmatpush.msra.mxu0 0.0
    %1574 = vmatpush.msra.mxu0 0.0
    %1575 = vmatpush.msra.mxu0 0.0
    %1576 = vmatpush.msra.mxu0 0.0
    %1577 = vmatpush.msra.mxu0 0.0
    %1578 = vmatpush.msra.mxu0 0.0
    %1579 = vmatpush.msra.mxu0 %v1560
    %1580 = vmatpush.msra.mxu0 %v1559
    %1581 = vmatpush.msra.mxu0 %v1558
    %1582 = vmatpush.msra.mxu0 %v1557
    %1583 = vmatmul.f32.gmra.mxu0 %v1562
    %v1584 = vpop.f32.mrf.mxu0
    %v1585 = vadd.f32 0.0, %v1584
    %1586 = vmatmul.f32.gmra.mxu0 %v1565
    %v1587 = vpop.f32.mrf.mxu0
    %v1588 = vadd.f32 0.0, %v1587
    %1589 = vdwg.mxu0
    %v1590 = vadd.f32 %v1553, %v1585
    %v1591 = vadd.f32 %v1554, %v1588
    %v1592 = vld [vmem:[%s962 + $0xa] sm:$0xff]
    %v1593 = vld [vmem:[%s962 + $0x12] sm:$0xff]
    %v1594 = vld [vmem:[%s701] sm:$0xff]
    %v1595 = vld [vmem:[%s701 + $0x8] sm:$0xff]
    %v1596 = vld [vmem:[%s701 + $0x10] sm:$0xff]
    %v1597 = vld [vmem:[%s701 + $0x18] sm:$0xff]
    %v1599 = vsel %vm42, %v1592, 0
    %v1602 = vsel %vm42, %v1593, 0
    %1604 = vmatpush.msra.mxu0 0.0
    %1605 = vmatpush.msra.mxu0 0.0
    %1606 = vmatpush.msra.mxu0 0.0
    %1607 = vmatpush.msra.mxu0 0.0
    %1608 = vmatpush.msra.mxu0 0.0
    %1609 = vmatpush.msra.mxu0 0.0
    %1610 = vmatpush.msra.mxu0 0.0
    %1611 = vmatpush.msra.mxu0 0.0
    %1612 = vmatpush.msra.mxu0 0.0
    %1613 = vmatpush.msra.mxu0 0.0
    %1614 = vmatpush.msra.mxu0 0.0
    %1615 = vmatpush.msra.mxu0 0.0
    %1616 = vmatpush.msra.mxu0 %v1597
    %1617 = vmatpush.msra.mxu0 %v1596
    %1618 = vmatpush.msra.mxu0 %v1595
    %1619 = vmatpush.msra.mxu0 %v1594
    %1620 = vmatmul.f32.gmra.mxu0 %v1599
    %v1621 = vpop.f32.mrf.mxu0
    %v1622 = vadd.f32 0.0, %v1621
    %1623 = vmatmul.f32.gmra.mxu0 %v1602
    %v1624 = vpop.f32.mrf.mxu0
    %v1625 = vadd.f32 0.0, %v1624
    %1626 = vdwg.mxu0
    %v1627 = vadd.f32 %v1590, %v1622
    %v1628 = vadd.f32 %v1591, %v1625
    %v1629 = vld [vmem:[%s6] sm:$0x1]
    %v1631 = vperm.slane %v1629, 0
    %v1633 = vadd.f32 %v1627, %v1631
    %v1634 = vadd.f32 %v1628, %v1631
    %v1635 = vmax.f32 %v1633, 0.0
    %v1636 = vmax.f32 %v1634, 0.0
    %1637 = vst.msk [vmem:[%s962 + $0x8] sm:$0xff] %vm42, %v1635
    %1638 = vst.msk [vmem:[%s962 + $0x10] sm:$0xff] %vm42, %v1636
    %v1639 = vld [vmem:[%s962 + $0x6] sm:$0xff]
    %v1640 = vld [vmem:[%s962 + $0xe] sm:$0xff]
    %v1641 = vld [vmem:[%s7] sm:$0xff]
    %v1642 = vld [vmem:[%s7 + $0x8] sm:$0xff]
    %v1643 = vld [vmem:[%s7 + $0x10] sm:$0xff]
    %v1644 = vld [vmem:[%s7 + $0x18] sm:$0xff]
    %v1645 = vld [vmem:[%s962 + $0x7] sm:$0xff]
    %v1646 = vld [vmem:[%s962 + $0xf] sm:$0xff]
    %v1647 = vld [vmem:[%s755] sm:$0xff]
    %v1648 = vld [vmem:[%s755 + $0x8] sm:$0xff]
    %v1649 = vld [vmem:[%s755 + $0x10] sm:$0xff]
    %v1650 = vld [vmem:[%s755 + $0x18] sm:$0xff]
    %v1652 = vsel %vm42, %v1645, 0
    %v1655 = vsel %vm42, %v1646, 0
    %1657 = vmatpush.msra.mxu0 0.0
    %1658 = vmatpush.msra.mxu0 0.0
    %1659 = vmatpush.msra.mxu0 0.0
    %1660 = vmatpush.msra.mxu0 0.0
    %1661 = vmatpush.msra.mxu0 0.0
    %1662 = vmatpush.msra.mxu0 0.0
    %1663 = vmatpush.msra.mxu0 0.0
    %1664 = vmatpush.msra.mxu0 0.0
    %1665 = vmatpush.msra.mxu0 0.0
    %1666 = vmatpush.msra.mxu0 0.0
    %1667 = vmatpush.msra.mxu0 0.0
    %1668 = vmatpush.msra.mxu0 0.0
    %1669 = vmatpush.msra.mxu0 %v1650
    %1670 = vmatpush.msra.mxu0 %v1649
    %1671 = vmatpush.msra.mxu0 %v1648
    %1672 = vmatpush.msra.mxu0 %v1647
    %1673 = vmatmul.f32.gmra.mxu0 %v1652
    %v1674 = vpop.f32.mrf.mxu0
    %v1675 = vadd.f32 0.0, %v1674
    %1676 = vmatmul.f32.gmra.mxu0 %v1655
    %v1677 = vpop.f32.mrf.mxu0
    %v1678 = vadd.f32 0.0, %v1677
    %1679 = vdwg.mxu0
    %v1681 = vsel %vm42, %v1639, 0
    %v1684 = vsel %vm42, %v1640, 0
    %1686 = vmatpush.msra.mxu0 0.0
    %1687 = vmatpush.msra.mxu0 0.0
    %1688 = vmatpush.msra.mxu0 0.0
    %1689 = vmatpush.msra.mxu0 0.0
    %1690 = vmatpush.msra.mxu0 0.0
    %1691 = vmatpush.msra.mxu0 0.0
    %1692 = vmatpush.msra.mxu0 0.0
    %1693 = vmatpush.msra.mxu0 0.0
    %1694 = vmatpush.msra.mxu0 0.0
    %1695 = vmatpush.msra.mxu0 0.0
    %1696 = vmatpush.msra.mxu0 0.0
    %1697 = vmatpush.msra.mxu0 0.0
    %1698 = vmatpush.msra.mxu0 %v1644
    %1699 = vmatpush.msra.mxu0 %v1643
    %1700 = vmatpush.msra.mxu0 %v1642
    %1701 = vmatpush.msra.mxu0 %v1641
    %1702 = vmatmul.f32.gmra.mxu0 %v1681
    %v1703 = vpop.f32.mrf.mxu0
    %v1704 = vadd.f32 %v1675, %v1703
    %1705 = vmatmul.f32.gmra.mxu0 %v1684
    %v1706 = vpop.f32.mrf.mxu0
    %v1707 = vadd.f32 %v1678, %v1706
    %1708 = vdwg.mxu0
    %v1709 = vld [vmem:[%s962 + $0x8] sm:$0xff]
    %v1710 = vld [vmem:[%s962 + $0x10] sm:$0xff]
    %v1711 = vld [vmem:[%s820] sm:$0xff]
    %v1712 = vld [vmem:[%s820 + $0x8] sm:$0xff]
    %v1713 = vld [vmem:[%s820 + $0x10] sm:$0xff]
    %v1714 = vld [vmem:[%s820 + $0x18] sm:$0xff]
    %v1716 = vsel %vm42, %v1709, 0
    %v1719 = vsel %vm42, %v1710, 0
    %1721 = vmatpush.msra.mxu0 0.0
    %1722 = vmatpush.msra.mxu0 0.0
    %1723 = vmatpush.msra.mxu0 0.0
    %1724 = vmatpush.msra.mxu0 0.0
    %1725 = vmatpush.msra.mxu0 0.0
    %1726 = vmatpush.msra.mxu0 0.0
    %1727 = vmatpush.msra.mxu0 0.0
    %1728 = vmatpush.msra.mxu0 0.0
    %1729 = vmatpush.msra.mxu0 0.0
    %1730 = vmatpush.msra.mxu0 0.0
    %1731 = vmatpush.msra.mxu0 0.0
    %1732 = vmatpush.msra.mxu0 0.0
    %1733 = vmatpush.msra.mxu0 %v1714
    %1734 = vmatpush.msra.mxu0 %v1713
    %1735 = vmatpush.msra.mxu0 %v1712
    %1736 = vmatpush.msra.mxu0 %v1711
    %1737 = vmatmul.f32.gmra.mxu0 %v1716
    %v1738 = vpop.f32.mrf.mxu0
    %v1739 = vadd.f32 0.0, %v1738
    %1740 = vmatmul.f32.gmra.mxu0 %v1719
    %v1741 = vpop.f32.mrf.mxu0
    %v1742 = vadd.f32 0.0, %v1741
    %1743 = vdwg.mxu0
    %v1744 = vadd.f32 %v1704, %v1739
    %v1745 = vadd.f32 %v1707, %v1742
    %v1746 = vld [vmem:[%s962 + $0x9] sm:$0xff]
    %v1747 = vld [vmem:[%s962 + $0x11] sm:$0xff]
    %v1748 = vld [vmem:[%s858] sm:$0xff]
    %v1749 = vld [vmem:[%s858 + $0x8] sm:$0xff]
    %v1750 = vld [vmem:[%s858 + $0x10] sm:$0xff]
    %v1751 = vld [vmem:[%s858 + $0x18] sm:$0xff]
    %v1753 = vsel %vm42, %v1746, 0
    %v1756 = vsel %vm42, %v1747, 0
    %1758 = vmatpush.msra.mxu0 0.0
    %1759 = vmatpush.msra.mxu0 0.0
    %1760 = vmatpush.msra.mxu0 0.0
    %1761 = vmatpush.msra.mxu0 0.0
    %1762 = vmatpush.msra.mxu0 0.0
    %1763 = vmatpush.msra.mxu0 0.0
    %1764 = vmatpush.msra.mxu0 0.0
    %1765 = vmatpush.msra.mxu0 0.0
    %1766 = vmatpush.msra.mxu0 0.0
    %1767 = vmatpush.msra.mxu0 0.0
    %1768 = vmatpush.msra.mxu0 0.0
    %1769 = vmatpush.msra.mxu0 0.0
    %1770 = vmatpush.msra.mxu0 %v1751
    %1771 = vmatpush.msra.mxu0 %v1750
    %1772 = vmatpush.msra.mxu0 %v1749
    %1773 = vmatpush.msra.mxu0 %v1748
    %1774 = vmatmul.f32.gmra.mxu0 %v1753
    %v1775 = vpop.f32.mrf.mxu0
    %v1776 = vadd.f32 0.0, %v1775
    %1777 = vmatmul.f32.gmra.mxu0 %v1756
    %v1778 = vpop.f32.mrf.mxu0
    %v1779 = vadd.f32 0.0, %v1778
    %1780 = vdwg.mxu0
    %v1781 = vadd.f32 %v1744, %v1776
    %v1782 = vadd.f32 %v1745, %v1779
    %v1783 = vld [vmem:[%s962 + $0xa] sm:$0xff]
    %v1784 = vld [vmem:[%s962 + $0x12] sm:$0xff]
    %v1785 = vld [vmem:[%s896] sm:$0xff]
    %v1786 = vld [vmem:[%s896 + $0x8] sm:$0xff]
    %v1787 = vld [vmem:[%s896 + $0x10] sm:$0xff]
    %v1788 = vld [vmem:[%s896 + $0x18] sm:$0xff]
    %v1790 = vsel %vm42, %v1783, 0
    %v1793 = vsel %vm42, %v1784, 0
    %1795 = vmatpush.msra.mxu0 0.0
    %1796 = vmatpush.msra.mxu0 0.0
    %1797 = vmatpush.msra.mxu0 0.0
    %1798 = vmatpush.msra.mxu0 0.0
    %1799 = vmatpush.msra.mxu0 0.0
    %1800 = vmatpush.msra.mxu0 0.0
    %1801 = vmatpush.msra.mxu0 0.0
    %1802 = vmatpush.msra.mxu0 0.0
    %1803 = vmatpush.msra.mxu0 0.0
    %1804 = vmatpush.msra.mxu0 0.0
    %1805 = vmatpush.msra.mxu0 0.0
    %1806 = vmatpush.msra.mxu0 0.0
    %1807 = vmatpush.msra.mxu0 %v1788
    %1808 = vmatpush.msra.mxu0 %v1787
    %1809 = vmatpush.msra.mxu0 %v1786
    %1810 = vmatpush.msra.mxu0 %v1785
    %1811 = vmatmul.f32.gmra.mxu0 %v1790
    %v1812 = vpop.f32.mrf.mxu0
    %v1813 = vadd.f32 0.0, %v1812
    %1814 = vmatmul.f32.gmra.mxu0 %v1793
    %v1815 = vpop.f32.mrf.mxu0
    %v1816 = vadd.f32 0.0, %v1815
    %1817 = vdwg.mxu0
    %v1818 = vadd.f32 %v1781, %v1813
    %v1819 = vadd.f32 %v1782, %v1816
    %v1820 = vld [vmem:[%s8] sm:$0x1]
    %v1822 = vperm.slane %v1820, 0
    %v1824 = vadd.f32 %v1818, %v1822
    %v1825 = vadd.f32 %v1819, %v1822
    %v1826 = vmax.f32 %v1824, 0.0
    %v1827 = vmax.f32 %v1825, 0.0
    %v1828 = vsel %vm364, %v1826, 0.0
    %v1829 = vsel %vm364, %v1827, 0.0
    %v1830 = vadd.f32 %v1828, %v1829
    %v1831 = vrot.slane %v1830, 4
    %v1832 = vadd.f32 %v1830, %v1831
    %v1833 = vrot.slane %v1832, 2
    %v1834 = vadd.f32 %v1832, %v1833
    %v1835 = vrot.slane %v1834, 1
    %v1836 = vadd.f32 %v1834, %v1835
    %v1837 = vmul.f32 %v1836, %v955
    %1838 = vst.msk [vmem:[#allocation3 + $0x1] sm:$0x1] %vm957, %v1837
    %v1839 = vld [vmem:[#allocation3] sm:$0x3]
    %v1840 = vld [vmem:[%s9] sm:$0xff]
    %v1841 = vld [vmem:[%s9 + $0x8] sm:$0xff]
    %v1842 = vld [vmem:[%s10] sm:$0x1]
    %v1844 = vperm.slane %v1842, 0
    %v1847 = vsel %vm364, %v1839, 0
    %1849 = vmatpush.msra.mxu0 0.0
    %1850 = vmatpush.msra.mxu0 0.0
    %1851 = vmatpush.msra.mxu0 0.0
    %1852 = vmatpush.msra.mxu0 0.0
    %1853 = vmatpush.msra.mxu0 0.0
    %1854 = vmatpush.msra.mxu0 0.0
    %1855 = vmatpush.msra.mxu0 0.0
    %1856 = vmatpush.msra.mxu0 0.0
    %1857 = vmatpush.msra.mxu0 0.0
    %1858 = vmatpush.msra.mxu0 0.0
    %1859 = vmatpush.msra.mxu0 0.0
    %1860 = vmatpush.msra.mxu0 0.0
    %1861 = vmatpush.msra.mxu0 0.0
    %1862 = vmatpush.msra.mxu0 0.0
    %1863 = vmatpush.msra.mxu0 %v1841
    %1864 = vmatpush.msra.mxu0 %v1840
    %1865 = vmatmul.f32.gmra.mxu0 %v1847
    %v1866 = vpop.f32.mrf.mxu0
    %v1867 = vadd.f32 %v1844, %v1866
    %1868 = vdwg.mxu0
    %vm1869 = vcmask 17408
    %1870 = vst.msk [vmem:[#allocation5] sm:$0x3] %vm1869, %v1867
    // Predicated region
    $region46: #{small_fcn_forward.1} parent=1 // pred_check
      _
    $region47: #{small_fcn_forward.1} parent=1 // pred_check_branch
      %1872 = sbr.rel (0) target = $region49
    $region48: #{small_fcn_forward.1} parent=1 // pred_region
      %1874 = vsyncadd [#allocation4], 0
      %s1876 = sshll.u32 [#allocation3], 4
      %s1877 = int_to_ptr.vmem [resolvable:$true] %s1876
      %s1878 = sshll.u32 %s11, 4
      %s1879 = int_to_ptr.hbm [resolvable:$true] %s1878
      %1881 = dma.vmem_to_hbm [thread:$0]  %s1877, 32, %s1879, [#allocation4]
    $region49: #{small_fcn_forward.1} parent=1 // pred_fallthru
      _
    // Predicated region
    $region50: #{small_fcn_forward.1} parent=1 // pred_check
      _
    $region51: #{small_fcn_forward.1} parent=1 // pred_check_branch
      %1883 = sbr.rel (0) target = $region53
    $region52: #{small_fcn_forward.1} parent=1 // pred_region
      %1885 = vsyncadd [#allocation6], 0
      %s1887 = sshll.u32 [#allocation5], 4
      %s1888 = int_to_ptr.vmem [resolvable:$true] %s1887
      %s1889 = sshll.u32 %s12, 4
      %s1890 = int_to_ptr.hbm [resolvable:$true] %s1889
      %1892 = dma.vmem_to_hbm [thread:$0]  %s1888, 32, %s1890, [#allocation6]
    $region53: #{small_fcn_forward.1} parent=1 // pred_fallthru
      _
    // Predicated region
    $region54: #{small_fcn_forward.1} parent=1 // pred_check
      _
    $region55: #{small_fcn_forward.1} parent=1 // pred_check_branch
      %1894 = sbr.rel (0) target = $region57
    $region56: #{small_fcn_forward.1} parent=1 // pred_region
      %1896 = dma.done [#allocation4], 32
    $region57: #{small_fcn_forward.1} parent=1 // pred_fallthru
      _
    // Predicated region
    $region58: #{small_fcn_forward.1} parent=1 // pred_check
      _
    $region59: #{small_fcn_forward.1} parent=1 // pred_check_branch
      %1898 = sbr.rel (0) target = $region61
    $region60: #{small_fcn_forward.1} parent=1 // pred_region
      %1900 = dma.done [#allocation6], 32
    $region61: #{small_fcn_forward.1} parent=1 // pred_fallthru
      _
    %1901 = vsyncpa [#allocation4], 1
    %1902 = vsyncpa [#allocation6], 1

</llo_original>
